<compile_context>
chip_gen: v6e
topology: v6e:2x2x1
jax: 0.10.0
libtpu: 0.0.40
codegen_flags: <defaults>
</compile_context>

<pallas_src>
import functools

import jax
import jax.numpy as jnp
from jax import lax
from jax.experimental import pallas as pl
from jax.experimental.pallas import tpu as pltpu


def _round_up(n, m):
    return ((n + m - 1) // m) * m


def _pick_tile(n, multiple=128, max_tile=8192):
    """Largest divisor of n that is a multiple of `multiple` and <= max_tile, else n."""
    if n <= max_tile:
        return n
    t = (max_tile // multiple) * multiple
    while t >= multiple:
        if n % t == 0:
            return t
        t -= multiple
    return n


# ----------------------- Kernel 1: per-anchor preprocess -----------------------
# Channel-major block [1, 5+nc, TA] (anchors on the lane axis).  Packed output
# [1, 6, TA]: rows 0..3 = xyxy boxes, 4 = max class score, 5 = class id (float).
def _make_preprocess_kernel(nc):
    def kernel(pred_ref, out_ref):
        cx = pred_ref[0, 0:1, :]
        cy = pred_ref[0, 1:2, :]
        w = pred_ref[0, 2:3, :]
        h = pred_ref[0, 3:4, :]
        conf = pred_ref[0, 4:5, :]
        cls = pred_ref[0, 5:5 + nc, :] * conf            # scores *= conf  [nc, TA]

        # boxes @ convert_matrix with the constants baked in (cxcywh -> xyxy)
        hw_ = 0.5 * w
        hh_ = 0.5 * h
        x1 = cx - hw_
        y1 = cy - hh_
        x2 = cx + hw_
        y2 = cy + hh_

        # per-anchor max / first-argmax over classes (sublane/XLU reduce)
        m = jnp.max(cls, axis=0, keepdims=True)          # [1, TA]
        ids = lax.broadcasted_iota(jnp.int32, cls.shape, 0)
        cat = jnp.min(jnp.where(cls == m, ids, jnp.int32(nc)),
                      axis=0, keepdims=True)             # [1, TA] int32

        out_ref[0] = jnp.concatenate(
            [x1, y1, x2, y2, m, cat.astype(jnp.float32)], axis=0)
    return kernel


def preprocess(pred_cm, nc):
    """pred_cm: [B, 5+nc, A_pad] channel-major, A_pad a multiple of 512."""
    B, no, A = pred_cm.shape
    ta = _pick_tile(A, multiple=512, max_tile=8192)       # always a 512-mult divisor
    n_a = A // ta
    kernel = _make_preprocess_kernel(nc)
    return pl.pallas_call(
        kernel,
        out_shape=jax.ShapeDtypeStruct((B, 6, A), jnp.float32),
        grid=(B, n_a),
        in_specs=[pl.BlockSpec((1, no, ta), lambda b, a: (b, 0, a))],
        out_specs=pl.BlockSpec((1, 6, ta), lambda b, a: (b, 0, a)),
        compiler_params=pltpu.CompilerParams(
            dimension_semantics=("parallel", "parallel")),
    )(pred_cm)


# ------ Kernel 2: per-batch mask matmul (coef @ proto) + sigmoid + bbox crop ---
def _make_mask_kernel():
    def kernel(coef_ref, proto_ref, box_ref, rc_ref, out_ref):
        # [max_obj, nm] @ [nm, THW] on the MXU (bf16 inputs, f32 accumulation).
        logits = jnp.dot(coef_ref[0], proto_ref[0],
                         preferred_element_type=jnp.float32)
        m = jax.nn.sigmoid(logits)                           # [max_obj, THW] f32

        box = box_ref[0]                                     # pre-scaled by pooler_scale
        x1 = box[:, 0:1]
        y1 = box[:, 1:2]
        x2 = box[:, 2:3]
        y2 = box[:, 3:4]
        r = rc_ref[0:1, :]                                   # [1, THW] (x / column)
        c = rc_ref[1:2, :]                                   # [1, THW] (y / row)
        keep = (r >= x1) & (r < x2) & (c >= y1) & (c < y2)
        out_ref[0] = jnp.where(keep, m, jnp.float32(0.0))
    return kernel


def mask_matmul_crop(det_coefs_bf16, proto_flat_bf16, det_boxes_scaled, proto_w):
    B, max_obj, nm = det_coefs_bf16.shape
    _, _, hw = proto_flat_bf16.shape
    thw = _pick_tile(hw, multiple=128, max_tile=8192)
    n_hw = hw // thw

    # crop coordinate maps, computed once (not per grid step), packed into one stream
    k = jnp.arange(hw, dtype=jnp.int32)
    rmap = (k % proto_w).astype(jnp.float32)                 # x / column
    cmap = (k // proto_w).astype(jnp.float32)                # y / row
    rc = jnp.stack([rmap, cmap], axis=0)                     # [2, hw]

    kernel = _make_mask_kernel()
    return pl.pallas_call(
        kernel,
        out_shape=jax.ShapeDtypeStruct((B, max_obj, hw), jnp.float32),
        grid=(B, n_hw),
        in_specs=[
            pl.BlockSpec((1, max_obj, nm), lambda b, h: (b, 0, 0)),   # mask coefs (bf16)
            pl.BlockSpec((1, nm, thw), lambda b, h: (b, 0, h)),       # proto[b] (bf16)
            pl.BlockSpec((1, max_obj, 4), lambda b, h: (b, 0, 0)),    # boxes (pre-scaled)
            pl.BlockSpec((2, thw), lambda b, h: (0, h)),              # r/c maps
        ],
        out_specs=pl.BlockSpec((1, max_obj, thw), lambda b, h: (b, 0, h)),
        compiler_params=pltpu.CompilerParams(
            dimension_semantics=("parallel", "parallel"),
            vmem_limit_bytes=40 * 1024 * 1024),
    )(det_coefs_bf16, proto_flat_bf16, det_boxes_scaled, rc)


# --------------- deterministic stand-in for the (random) TRT_NMS3 --------------
def synthetic_nms(max_score, score_threshold, max_obj):
    # max_score: [B, A].  Returns selected_indices [B*max_obj, 3] int32 rows
    # [batch, 0, anchor], valid detections first (sorted by batch), zero padded.
    B, A = max_score.shape
    vals, anchors = lax.top_k(max_score, max_obj)             # [B, max_obj]
    valid = vals > jnp.float32(score_threshold)
    batch_ids = jnp.repeat(jnp.arange(B, dtype=jnp.int32), max_obj)
    flat_anchor = anchors.reshape(-1).astype(jnp.int32)
    flat_valid = valid.reshape(-1)
    key = jnp.where(flat_valid, batch_ids, jnp.int32(B + 1))
    order = jnp.argsort(key)                                  # valid rows first, by batch
    sel_batch = jnp.where(flat_valid[order], batch_ids[order], 0)
    sel_anchor = jnp.where(flat_valid[order], flat_anchor[order], 0)
    zeros = jnp.zeros_like(sel_batch)
    return jnp.stack([sel_batch, zeros, sel_anchor], axis=1)  # [B*max_obj, 3]


# --------------------------------- full forward --------------------------------
def onnx_trt_forward(pred, proto, *, nc=80, max_obj=100, max_wh=640,
                     pooler_scale=0.25, score_thres=0.25):
    del max_wh  # only used by the dead nmsbox offset (NMS is mocked), dropped
    B, A, _no = pred.shape
    _, nm, ph, pw = proto.shape
    hw = ph * pw

    # slice off the nm mask-coef channels BEFORE the transpose (don't DMA dead bytes),
    # then one channel-major transpose so the preprocess kernel is fully lane-dense.
    pred_head = pred[:, :, :5 + nc]                           # [B, A, 5+nc]
    pred_cm = jnp.transpose(pred_head, (0, 2, 1))             # [B, 5+nc, A]

    # pad anchors to a multiple of 512 so the anchor tile is always lane-aligned
    # and pipelined; padded anchors are sliced away again below.
    A_pad = _round_up(A, 512)
    if A_pad != A:
        pred_cm = jnp.pad(pred_cm, ((0, 0), (0, 0), (0, A_pad - A)))

    packed = preprocess(pred_cm, nc)                          # [B, 6, A_pad]
    boxes_cm = packed[:, 0:4, :A]                             # [B, 4, A] (xyxy)
    max_score = packed[:, 4, :A]                              # [B, A]
    category = packed[:, 5, :A]                               # [B, A] (float class id)
    mask_coefs = pred[:, :, 5 + nc:5 + nc + nm]               # [B, A, nm]

    selected_indices = synthetic_nms(max_score, score_thres, max_obj)  # [T, 3]
    total_object = selected_indices.shape[0]
    X = selected_indices[:, 0]
    Y = selected_indices[:, 2]

    selected_boxes = boxes_cm[X, :, Y]                        # [T, 4]
    selected_categories = category[X, Y][:, None]             # [T, 1]
    selected_scores = max_score[X, Y][:, None]                # [T, 1]
    selected_mask = mask_coefs[X, Y, :]                       # [T, nm]

    # ---- num_object / per-batch detection bookkeeping (matches reference) ----
    ar_T = jnp.arange(total_object, dtype=jnp.int32)
    num_object1 = (jnp.argmax(jnp.where(selected_indices.sum(axis=1) > 0, ar_T, 0)
                              .astype(jnp.float32)) + 1).reshape((1,))
    lag = (selected_indices[1:] - selected_indices[:-1]).sum(axis=1)
    num_object2 = (jnp.argmax(jnp.where(lag != 0,
                                        jnp.arange(total_object - 1, dtype=jnp.int32),
                                        0).astype(jnp.float32)) + 2).reshape((1,))
    num_object = (lag.sum() != 0).astype(jnp.float32) * jnp.minimum(num_object1, num_object2)

    in_range = (ar_T < num_object)[:, None]                   # [T, 1]
    batch_match = X[:, None] == jnp.arange(B, dtype=X.dtype)[None, :]   # [T, B]
    batch_indices_per_batch = jnp.where(batch_match & in_range, 1, 0).astype(jnp.int32)

    num_det = batch_indices_per_batch.sum(axis=0).reshape(B, 1).astype(jnp.int32)

    weighted = batch_indices_per_batch.astype(jnp.float32) * ar_T.astype(jnp.float32)[:, None]
    idxs = lax.top_k(weighted.T, max_obj)[0].reshape(-1).astype(jnp.int32)  # [B*max_obj]

    det_boxes = selected_boxes[idxs].reshape(B, max_obj, 4).astype(jnp.float32)
    det_scores = selected_scores[idxs].reshape(B, max_obj, 1).astype(jnp.float32)
    det_classes = selected_categories[idxs].reshape(B, max_obj, 1).astype(jnp.float32)
    det_coefs = selected_mask[idxs].reshape(B, max_obj, nm).astype(jnp.bfloat16)

    # Masks are computed after the per-batch gather so ONE MXU matmul per batch
    # covers all max_obj detections of that batch using proto[b].  Zero-padded
    # slots (idx 0) are invalid detections, so using proto[b] for them is harmless.
    proto_flat = proto.reshape(B, nm, hw).astype(jnp.bfloat16)
    det_boxes_scaled = det_boxes * jnp.float32(pooler_scale)  # hoisted out of the kernel
    det_masks = mask_matmul_crop(det_coefs, proto_flat, det_boxes_scaled,
                                 pw).astype(jnp.float32)      # [B, max_obj, hw]

    return num_det, det_boxes, det_scores, det_classes, det_masks


if __name__ == "__main__":
    B, A = 2, 128
    nc, nm = 80, 32
    ph = pw = 16
    max_obj = 100

    key = jax.random.PRNGKey(0)
    k1, k2, k3, k4, k5, k6 = jax.random.split(key, 6)
    cxcy = jax.random.uniform(k1, (B, A, 2), minval=8.0, maxval=56.0)
    wh = jax.random.uniform(k2, (B, A, 2), minval=4.0, maxval=16.0)
    conf = jax.random.uniform(k3, (B, A, 1), minval=0.0, maxval=1.0)
    cls = jax.random.uniform(k4, (B, A, nc), minval=0.0, maxval=1.0)
    mcoef = jax.random.normal(k5, (B, A, nm)) * 0.5
    pred = jnp.concatenate([cxcy, wh, conf, cls, mcoef], axis=-1).astype(jnp.float32)
    proto = jax.random.normal(k6, (B, nm, ph, pw), dtype=jnp.float32)

    fwd = jax.jit(functools.partial(onnx_trt_forward, nc=nc, max_obj=max_obj,
                                    max_wh=640, pooler_scale=0.25, score_thres=0.25))
    num_det, det_boxes, det_scores, det_classes, det_masks = fwd(pred, proto)
    jax.block_until_ready((num_det, det_boxes, det_scores, det_classes, det_masks))

    assert num_det.shape == (B, 1)
    assert det_boxes.shape == (B, max_obj, 4)
    assert det_scores.shape == (B, max_obj, 1)
    assert det_classes.shape == (B, max_obj, 1)
    assert det_masks.shape == (B, max_obj, ph * pw)
    print("KERNEL_OK")
</pallas_src>

<mosaic_0001>
module attributes {stable_mosaic.version = 11 : i64} {
  func.func @kernel(%arg0: i32, %arg1: i32, %arg2: memref<1x85x512xf32, #tpu.memory_space<vmem>>, %arg3: memref<1x6x512xf32, #tpu.memory_space<vmem>>) attributes {dimension_semantics = [#tpu.dimension_semantics<parallel>, #tpu.dimension_semantics<parallel>], iteration_bounds = array<i64: 2, 1>, scalar_prefetch = 0 : i64, scratch_operands = 0 : i64, tpu.core_type = #tpu.core_type<tc>, window_params = [{transform_indices = @transform_0, window_bounds = array<i64: 1, 85, 512>}, {transform_indices = @transform_1, window_bounds = array<i64: 1, 6, 512>}]} {
    %c0 = arith.constant 0 : index
    %c0_0 = arith.constant 0 : index
    %c0_1 = arith.constant 0 : index
    %0 = vector.load %arg2[%c0, %c0_0, %c0_1] : memref<1x85x512xf32, #tpu.memory_space<vmem>>, vector<1x1x512xf32>
    %1 = vector.shape_cast %0 : vector<1x1x512xf32> to vector<1x512xf32>
    %c0_2 = arith.constant 0 : index
    %c1 = arith.constant 1 : index
    %c0_3 = arith.constant 0 : index
    %2 = vector.load %arg2[%c0_2, %c1, %c0_3] : memref<1x85x512xf32, #tpu.memory_space<vmem>>, vector<1x1x512xf32>
    %3 = vector.shape_cast %2 : vector<1x1x512xf32> to vector<1x512xf32>
    %c0_4 = arith.constant 0 : index
    %c2 = arith.constant 2 : index
    %c0_5 = arith.constant 0 : index
    %4 = vector.load %arg2[%c0_4, %c2, %c0_5] : memref<1x85x512xf32, #tpu.memory_space<vmem>>, vector<1x1x512xf32>
    %5 = vector.shape_cast %4 : vector<1x1x512xf32> to vector<1x512xf32>
    %c0_6 = arith.constant 0 : index
    %c3 = arith.constant 3 : index
    %c0_7 = arith.constant 0 : index
    %6 = vector.load %arg2[%c0_6, %c3, %c0_7] : memref<1x85x512xf32, #tpu.memory_space<vmem>>, vector<1x1x512xf32>
    %7 = vector.shape_cast %6 : vector<1x1x512xf32> to vector<1x512xf32>
    %c0_8 = arith.constant 0 : index
    %c4 = arith.constant 4 : index
    %c0_9 = arith.constant 0 : index
    %8 = vector.load %arg2[%c0_8, %c4, %c0_9] : memref<1x85x512xf32, #tpu.memory_space<vmem>>, vector<1x1x512xf32>
    %9 = vector.shape_cast %8 : vector<1x1x512xf32> to vector<1x512xf32>
    %c0_10 = arith.constant 0 : index
    %c5 = arith.constant 5 : index
    %c0_11 = arith.constant 0 : index
    %10 = vector.load %arg2[%c0_10, %c5, %c0_11] : memref<1x85x512xf32, #tpu.memory_space<vmem>>, vector<1x80x512xf32>
    %11 = vector.shape_cast %10 : vector<1x80x512xf32> to vector<80x512xf32>
    %12 = vector.broadcast %9 : vector<1x512xf32> to vector<80x512xf32>
    %13 = arith.mulf %11, %12 : vector<80x512xf32>
    %cst = arith.constant 5.000000e-01 : f32
    %14 = vector.broadcast %cst : f32 to vector<1x512xf32>
    %15 = arith.mulf %14, %5 : vector<1x512xf32>
    %cst_12 = arith.constant 5.000000e-01 : f32
    %16 = vector.broadcast %cst_12 : f32 to vector<1x512xf32>
    %17 = arith.mulf %16, %7 : vector<1x512xf32>
    %18 = arith.subf %1, %15 : vector<1x512xf32>
    %19 = arith.subf %3, %17 : vector<1x512xf32>
    %20 = arith.addf %1, %15 : vector<1x512xf32>
    %21 = arith.addf %3, %17 : vector<1x512xf32>
    %cst_13 = arith.constant dense<0xFF800000> : vector<512xf32>
    %22 = vector.multi_reduction <maximumf>, %13, %cst_13 [0] : vector<80x512xf32> to vector<512xf32>
    %23 = vector.shape_cast %22 : vector<512xf32> to vector<1x512xf32>
    %24 = tpu.iota {dimensions = array<i32: 0>} : vector<80x512xi32>
    %25 = vector.broadcast %23 : vector<1x512xf32> to vector<80x512xf32>
    %26 = arith.cmpf oeq, %13, %25 : vector<80x512xf32>
    %c80_i32 = arith.constant 80 : i32
    %27 = vector.broadcast %c80_i32 : i32 to vector<80x512xi32>
    %28 = arith.select %26, %24, %27 : vector<80x512xi1>, vector<80x512xi32>
    %cst_14 = arith.constant dense<2147483647> : vector<512xi32>
    %29 = vector.multi_reduction <minsi>, %28, %cst_14 [0] : vector<80x512xi32> to vector<512xi32>
    %30 = vector.shape_cast %29 : vector<512xi32> to vector<1x512xi32>
    %31 = arith.sitofp %30 : vector<1x512xi32> to vector<1x512xf32>
    %32 = tpu.concatenate %18, %19, %20, %21, %23, %31 in 0 : vector<1x512xf32>, vector<1x512xf32>, vector<1x512xf32>, vector<1x512xf32>, vector<1x512xf32>, vector<1x512xf32> -> vector<6x512xf32>
    %c0_15 = arith.constant 0 : index
    %c0_16 = arith.constant 0 : index
    %c0_17 = arith.constant 0 : index
    %33 = vector.load %arg3[%c0_15, %c0_16, %c0_17] : memref<1x6x512xf32, #tpu.memory_space<vmem>>, vector<1x6x512xf32>
    %34 = vector.shape_cast %33 : vector<1x6x512xf32> to vector<6x512xf32>
    %35 = vector.shape_cast %32 : vector<6x512xf32> to vector<1x6x512xf32>
    tpu.vector_store %arg3[%c0_15, %c0_16, %c0_17], %35 {strides = array<i32>} : memref<1x6x512xf32, #tpu.memory_space<vmem>>, vector<1x6x512xf32>,
    return
  }
  func.func @transform_0(%arg0: i32, %arg1: i32) -> (i32, i32, i32) {
    %c0_i32 = arith.constant 0 : i32
    %c0_i32_0 = arith.constant 0 : i32
    return %arg0, %c0_i32, %arg1 : i32, i32, i32
  }
  func.func @transform_1(%arg0: i32, %arg1: i32) -> (i32, i32, i32) {
    %c0_i32 = arith.constant 0 : i32
    %c0_i32_0 = arith.constant 0 : i32
    return %arg0, %c0_i32, %arg1 : i32, i32, i32
  }
}

module attributes {stable_mosaic.version = 11 : i64} {
  func.func @kernel(%arg0: i32, %arg1: i32, %arg2: memref<1x100x32xbf16, #tpu.memory_space<vmem>>, %arg3: memref<1x32x256xbf16, #tpu.memory_space<vmem>>, %arg4: memref<1x100x4xf32, #tpu.memory_space<vmem>>, %arg5: memref<2x256xf32, #tpu.memory_space<vmem>>, %arg6: memref<1x100x256xf32, #tpu.memory_space<vmem>>) attributes {dimension_semantics = [#tpu.dimension_semantics<parallel>, #tpu.dimension_semantics<parallel>], iteration_bounds = array<i64: 2, 1>, scalar_prefetch = 0 : i64, scratch_operands = 0 : i64, tpu.core_type = #tpu.core_type<tc>, window_params = [{transform_indices = @transform_0, window_bounds = array<i64: 1, 100, 32>}, {transform_indices = @transform_1, window_bounds = array<i64: 1, 32, 256>}, {transform_indices = @transform_2, window_bounds = array<i64: 1, 100, 4>}, {transform_indices = @transform_3, window_bounds = array<i64: 2, 256>}, {transform_indices = @transform_4, window_bounds = array<i64: 1, 100, 256>}]} {
    %c0 = arith.constant 0 : index
    %c0_0 = arith.constant 0 : index
    %c0_1 = arith.constant 0 : index
    %0 = vector.load %arg2[%c0, %c0_0, %c0_1] : memref<1x100x32xbf16, #tpu.memory_space<vmem>>, vector<1x100x32xbf16>
    %1 = vector.shape_cast %0 : vector<1x100x32xbf16> to vector<100x32xbf16>
    %c0_2 = arith.constant 0 : index
    %c0_3 = arith.constant 0 : index
    %c0_4 = arith.constant 0 : index
    %2 = vector.load %arg3[%c0_2, %c0_3, %c0_4] : memref<1x32x256xbf16, #tpu.memory_space<vmem>>, vector<1x32x256xbf16>
    %3 = vector.shape_cast %2 : vector<1x32x256xbf16> to vector<32x256xbf16>
    %cst = arith.constant dense<0.000000e+00> : vector<100x256xf32>
    %4 = tpu.matmul %1, %3, %cst {dimension_numbers = #tpu.dot_dimension_numbers<[1], [0], [0], [1], [0, 0, 1, 1], [], []>} : vector<100x32xbf16>, vector<32x256xbf16>, vector<100x256xf32> -> vector<100x256xf32>
    %5 = arith.negf %4 : vector<100x256xf32>
    %6 = math.exp %5 : vector<100x256xf32>
    %cst_5 = arith.constant 1.000000e+00 : f32
    %7 = vector.broadcast %cst_5 : f32 to vector<100x256xf32>
    %8 = arith.addf %7, %6 : vector<100x256xf32>
    %9 = arith.divf %7, %8 : vector<100x256xf32>
    %c0_6 = arith.constant 0 : index
    %c0_7 = arith.constant 0 : index
    %c0_8 = arith.constant 0 : index
    %10 = vector.load %arg4[%c0_6, %c0_7, %c0_8] : memref<1x100x4xf32, #tpu.memory_space<vmem>>, vector<1x100x4xf32>
    %11 = vector.shape_cast %10 : vector<1x100x4xf32> to vector<100x4xf32>
    %12 = vector.extract_strided_slice %11 {offsets = [0, 0], sizes = [100, 1], strides = [1, 1]} : vector<100x4xf32> to vector<100x1xf32>
    %13 = vector.extract_strided_slice %11 {offsets = [0, 1], sizes = [100, 1], strides = [1, 1]} : vector<100x4xf32> to vector<100x1xf32>
    %14 = vector.extract_strided_slice %11 {offsets = [0, 2], sizes = [100, 1], strides = [1, 1]} : vector<100x4xf32> to vector<100x1xf32>
    %15 = vector.extract_strided_slice %11 {offsets = [0, 3], sizes = [100, 1], strides = [1, 1]} : vector<100x4xf32> to vector<100x1xf32>
    %c0_9 = arith.constant 0 : index
    %c0_10 = arith.constant 0 : index
    %16 = vector.load %arg5[%c0_9, %c0_10] : memref<2x256xf32, #tpu.memory_space<vmem>>, vector<1x256xf32>
    %c1 = arith.constant 1 : index
    %c0_11 = arith.constant 0 : index
    %17 = vector.load %arg5[%c1, %c0_11] : memref<2x256xf32, #tpu.memory_space<vmem>>, vector<1x256xf32>
    %18 = vector.broadcast %16 : vector<1x256xf32> to vector<100x256xf32>
    %19 = vector.broadcast %12 : vector<100x1xf32> to vector<100x256xf32>
    %20 = arith.cmpf oge, %18, %19 : vector<100x256xf32>
    %21 = vector.broadcast %16 : vector<1x256xf32> to vector<100x256xf32>
    %22 = vector.broadcast %14 : vector<100x1xf32> to vector<100x256xf32>
    %23 = arith.cmpf olt, %21, %22 : vector<100x256xf32>
    %24 = arith.andi %20, %23 : vector<100x256xi1>
    %25 = vector.broadcast %17 : vector<1x256xf32> to vector<100x256xf32>
    %26 = vector.broadcast %13 : vector<100x1xf32> to vector<100x256xf32>
    %27 = arith.cmpf oge, %25, %26 : vector<100x256xf32>
    %28 = arith.andi %24, %27 : vector<100x256xi1>
    %29 = vector.broadcast %17 : vector<1x256xf32> to vector<100x256xf32>
    %30 = vector.broadcast %15 : vector<100x1xf32> to vector<100x256xf32>
    %31 = arith.cmpf olt, %29, %30 : vector<100x256xf32>
    %32 = arith.andi %28, %31 : vector<100x256xi1>
    %cst_12 = arith.constant 0.000000e+00 : f32
    %33 = vector.broadcast %cst_12 : f32 to vector<100x256xf32>
    %34 = arith.select %32, %9, %33 : vector<100x256xi1>, vector<100x256xf32>
    %c0_13 = arith.constant 0 : index
    %c0_14 = arith.constant 0 : index
    %c0_15 = arith.constant 0 : index
    %35 = vector.load %arg6[%c0_13, %c0_14, %c0_15] : memref<1x100x256xf32, #tpu.memory_space<vmem>>, vector<1x100x256xf32>
    %36 = vector.shape_cast %35 : vector<1x100x256xf32> to vector<100x256xf32>
    %37 = vector.shape_cast %34 : vector<100x256xf32> to vector<1x100x256xf32>
    tpu.vector_store %arg6[%c0_13, %c0_14, %c0_15], %37 {strides = array<i32>} : memref<1x100x256xf32, #tpu.memory_space<vmem>>, vector<1x100x256xf32>,
    return
  }
  func.func @transform_0(%arg0: i32, %arg1: i32) -> (i32, i32, i32) {
    %c0_i32 = arith.constant 0 : i32
    %c0_i32_0 = arith.constant 0 : i32
    %c0_i32_1 = arith.constant 0 : i32
    return %arg0, %c0_i32, %c0_i32_0 : i32, i32, i32
  }
  func.func @transform_1(%arg0: i32, %arg1: i32) -> (i32, i32, i32) {
    %c0_i32 = arith.constant 0 : i32
    %c0_i32_0 = arith.constant 0 : i32
    return %arg0, %c0_i32, %arg1 : i32, i32, i32
  }
  func.func @transform_2(%arg0: i32, %arg1: i32) -> (i32, i32, i32) {
    %c0_i32 = arith.constant 0 : i32
    %c0_i32_0 = arith.constant 0 : i32
    %c0_i32_1 = arith.constant 0 : i32
    return %arg0, %c0_i32, %c0_i32_0 : i32, i32, i32
  }
  func.func @transform_3(%arg0: i32, %arg1: i32) -> (i32, i32) {
    %c0_i32 = arith.constant 0 : i32
    %c0_i32_0 = arith.constant 0 : i32
    return %c0_i32, %arg1 : i32, i32
  }
  func.func @transform_4(%arg0: i32, %arg1: i32) -> (i32, i32, i32) {
    %c0_i32 = arith.constant 0 : i32
    %c0_i32_0 = arith.constant 0 : i32
    return %arg0, %c0_i32, %arg1 : i32, i32, i32
  }
}

</mosaic_0001>

<llo_original>
// kernel: onnx_trt_forward.2
$region0: #{onnx_trt_forward.2}
  #allocation0 [shape = 'u32[]', space=smem, size = 0x4, offset = 0x4, fixed_abs, tag = 'smem constant byte address 0x4 - core index']
  #allocation1 [shape = 'u32[144,128]{1,0:T(1,128)}', space=vmem, size = 0x12000, scoped, tag = 'internal scratch']
  %s0 = inlined_call_operand.vmem [shape: f32[2,85,512], index: 0, kind: input, shape index: {}]
  %s1 = inlined_call_operand.vmem [shape: f32[2,6,512], index: 1, kind: output, shape index: {}]
  %s2 = sld [smem:[#allocation0]]
  $region37: #{onnx_trt_forward.2} parent=0
    _
  %s4 = ssub.s32 1, %s2
  %s5 = scalar_select 0, %s4, %s2
  loop: start=0, step=1, limit=4
  $region2: #{onnx_trt_forward.2} parent=0 // loop_pre_header
    _
  $region3: #{onnx_trt_forward.2} parent=0 // loop_header
    %s7 = sphi 0, %s11
    %p8 = scmp.ge.s32.totalorder %s7, 4
    %s14 = sphi 0, %s26
    %s15 = sphi 0, %s22
    %s16 = sphi 0, %s14
    %s17 = sphi 0, %s15
    %s18 = sphi 0, %s16
    %s19 = sphi 0, %s17
    %s31 = sphi 0, %s33
    %s34 = sphi 0, %s31
    %s35 = sphi 0, %s34
    %s51 = sphi 0, %s35
    %s59 = sphi 0, %s61
    %s62 = sphi 0, %s59
    %s63 = sphi 0, %s62
    %s79 = sphi 0, %s63
  $region4: #{onnx_trt_forward.2} parent=0 // loop_header_branch
    %10 = sbr.rel (%p8) target = $region8
  $region5: #{onnx_trt_forward.2} parent=0 // loop_body
    %s12 = ssub.s32 %s7, 1
    %s13 = ssub.s32 %s7, 2
    %s20 = sadd.s32 1, %s15
    %p21 = scmp.ge.s32.totalorder %s20, 1
    %s22 = scalar_select %p21, 0, %s20
    %s23 = sadd.s32 1, %s14
    %s24 = scalar_select %p21, %s23, %s14
    %p25 = scmp.ge.s32.totalorder %s24, 2
    %s26 = scalar_select %p25, 0, %s24
    %s27 = ssub.s32 %s14, %s26
    %s28 = ssub.s32 %s15, %s22
    %s29 = sor.u32 %s27, %s28
    %p30 = scmp.eq.s32.totalorder %s29, 0
    %s32 = sadd.s32 %s31, 1
    %s33 = scalar_select %p30, %s31, %s32
    %p36 = pneg %p30
    %p37 = scmp.eq.s32.totalorder %s7, 1
    %p38 = por %p36, %p37
    %p39 = scmp.ne.s32.totalorder %s31, %s34
    %p40 = scmp.eq.s32.totalorder %s7, 0
    %p41 = por %p39, %p40
    %p42 = scmp.ne.s32.totalorder %s31, %s34
    %p43 = scmp.eq.s32.totalorder %s12, 1
    %p44 = por %p42, %p43
    %p45 = scmp.ne.s32.totalorder %s34, %s35
    %p46 = scmp.eq.s32.totalorder %s12, 0
    %p47 = por %p45, %p46
    %p48 = scmp.ne.s32.totalorder %s34, %s35
    %p49 = scmp.eq.s32.totalorder %s13, 1
    %p50 = por %p48, %p49
    %p52 = scmp.ne.s32.totalorder %s35, %s51
    %p53 = scmp.eq.s32.totalorder %s13, 0
    %p54 = por %p52, %p53
    %s55 = ssub.s32 %s14, %s26
    %s56 = ssub.s32 %s15, %s22
    %s57 = sor.u32 %s55, %s56
    %p58 = scmp.eq.s32.totalorder %s57, 0
    %s60 = sadd.s32 %s59, 1
    %s61 = scalar_select %p58, %s59, %s60
    %p64 = pneg %p58
    %p65 = scmp.eq.s32.totalorder %s7, 1
    %p66 = por %p64, %p65
    %p67 = scmp.ne.s32.totalorder %s59, %s62
    %p68 = scmp.eq.s32.totalorder %s7, 0
    %p69 = por %p67, %p68
    %p70 = scmp.ne.s32.totalorder %s59, %s62
    %p71 = scmp.eq.s32.totalorder %s12, 1
    %p72 = por %p70, %p71
    %p73 = scmp.ne.s32.totalorder %s62, %s63
    %p74 = scmp.eq.s32.totalorder %s12, 0
    %p75 = por %p73, %p74
    %p76 = scmp.ne.s32.totalorder %s62, %s63
    %p77 = scmp.eq.s32.totalorder %s13, 1
    %p78 = por %p76, %p77
    %p80 = scmp.ne.s32.totalorder %s63, %s79
    %p81 = scmp.eq.s32.totalorder %s13, 0
    %p82 = por %p80, %p81
    %p83 = scmp.le.s32.totalorder 1, %s7
    %p84 = scmp.lt.s32.totalorder %s7, 3
    %p85 = pnand %p83, %p84
    %p86 = pneg %p85
    // Predicated region
    $region9: #{onnx_trt_forward.2} parent=5 // pred_check
      _
    $region10: #{onnx_trt_forward.2} parent=5 // pred_check_branch
      %88 = sbr.rel (%p85) target = $region12
    $region11: #{onnx_trt_forward.2} parent=5 // pred_region
      %s89 = ssub.s32 %s7, 1
    $region12: #{onnx_trt_forward.2} parent=5 // pred_fallthru
      _
    %p90 = scmp.lt.s32.totalorder %s7, 2
    // Predicated region
    $region13: #{onnx_trt_forward.2} parent=5 // pred_check
      %p91 = pneg %p90
    $region14: #{onnx_trt_forward.2} parent=5 // pred_check_branch
      %93 = sbr.rel (%p91) target = $region16
    $region15: #{onnx_trt_forward.2} parent=5 // pred_region
      // Predicated region
      $region17: #{onnx_trt_forward.2} parent=15 // pred_check
        %p94 = pneg %p41
      $region18: #{onnx_trt_forward.2} parent=15 // pred_check_branch
        %96 = sbr.rel (%p94) target = $region20
      $region19: #{onnx_trt_forward.2} parent=15 // pred_region
        %s97 = smul.u32 4, %s15
        %p98 = scmp.lt.s32.totalorder %s14, 1
        %s99 = scalar_select %p98, %s14, 1
        %p100 = scmp.lt.s32.totalorder %s97, 3
        %s101 = scalar_select %p100, %s97, 3
        %s102 = smul.addr %s99, 44
        %s103 = sadd.s32 %s101, %s102
        %s104 = smul.addr %s103, 8
        %s105 = scalar_lea.vmem %s0, %s104
        %s106 = smul.u32 4, %s15
      $region20: #{onnx_trt_forward.2} parent=15 // pred_fallthru
        _
    $region16: #{onnx_trt_forward.2} parent=5 // pred_fallthru
      _
    %p107 = scmp.le.s32.totalorder 1, %s7
    %p108 = scmp.lt.s32.totalorder %s7, 3
    %p109 = pnand %p107, %p108
    %p110 = pneg %p109
    // Predicated region
    $region21: #{onnx_trt_forward.2} parent=5 // pred_check
      _
    $region22: #{onnx_trt_forward.2} parent=5 // pred_check_branch
      %112 = sbr.rel (%p109) target = $region24
    $region23: #{onnx_trt_forward.2} parent=5 // pred_region
      %s113 = ssub.s32 %s7, 1
      %s114 = smul.u32 4, %s17
      %p115 = scmp.lt.s32.totalorder %s16, 1
      %s116 = scalar_select %p115, %s16, 1
      %p117 = scmp.lt.s32.totalorder %s114, 3
      %s118 = scalar_select %p117, %s114, 3
      %s119 = smul.addr %s116, 44
      %s120 = sadd.s32 %s118, %s119
      %s121 = smul.addr %s120, 8
      %s122 = scalar_lea.vmem %s0, %s121
      %p123 = pneg %p47
      %p124 = pneg %p44
      %p125 = pneg %p75
      %p126 = pneg %p72
      %s127 = smul.u32 4, %s17
      %p128 = scmp.lt.s32.totalorder %s16, 1
      %s129 = scalar_select %p128, %s16, 1
      %p130 = scmp.lt.s32.totalorder %s127, 3
      %s131 = scalar_select %p130, %s127, 3
      %s132 = smul.addr %s129, 4
      %s133 = sadd.s32 %s131, %s132
      %s134 = smul.addr %s133, 8
      %s135 = scalar_lea.vmem %s1, %s134
      %s136 = smul.u32 4, %s17
      %p137 = scmp.lt.s32.totalorder %s16, 1
      %s138 = scalar_select %p137, %s16, 1
      %p139 = scmp.lt.s32.totalorder %s136, 3
      %s140 = scalar_select %p139, %s136, 3
      %s141 = smul.addr %s138, 44
      %s142 = sadd.s32 %s140, %s141
      %s143 = smul.addr %s142, 8
      %s144 = scalar_lea.vmem %s0, %s143
      %s145 = smul.u32 4, %s17
      %s146 = smul.u32 4, %s17
      %p147 = scmp.lt.s32.totalorder %s16, 1
      %s148 = scalar_select %p147, %s16, 1
      %p149 = scmp.lt.s32.totalorder %s146, 3
      %s150 = scalar_select %p149, %s146, 3
      %s151 = smul.addr %s148, 4
      %s152 = sadd.s32 %s150, %s151
      %s153 = smul.addr %s152, 8
      %s154 = scalar_lea.vmem %s1, %s153
      %s155 = smul.u32 4, %s17
      %v156 = vld [vmem:[%s144] ss:$8 sm:$0xf]
      %s157 = scalar_lea.vmem %s144, 1
      %v158 = vld [vmem:[%s157] ss:$8 sm:$0xf]
      %s159 = scalar_lea.vmem %s144, 2
      %v160 = vld [vmem:[%s159] ss:$8 sm:$0xf]
      %s161 = scalar_lea.vmem %s144, 3
      %v162 = vld [vmem:[%s161] ss:$8 sm:$0xf]
      %s163 = scalar_lea.vmem %s144, 4
      %v164 = vld [vmem:[%s163] ss:$8 sm:$0xf]
      %v165 = vld [vmem:[%s144] sm:$0xe0]
      %v166 = vld [vmem:[%s144 + $0x8] sm:$0xe0]
      %v167 = vld [vmem:[%s144 + $0x10] sm:$0xe0]
      %v168 = vld [vmem:[%s144 + $0x18] sm:$0xe0]
      %v169 = vld [vmem:[%s144 + $0x20] sm:$0xff]
      %v170 = vld [vmem:[%s144 + $0x28] sm:$0xff]
      %v171 = vld [vmem:[%s144 + $0x30] sm:$0xff]
      %v172 = vld [vmem:[%s144 + $0x38] sm:$0xff]
      %v173 = vld [vmem:[%s144 + $0x40] sm:$0xff]
      %v174 = vld [vmem:[%s144 + $0x48] sm:$0xff]
      %v175 = vld [vmem:[%s144 + $0x50] sm:$0xff]
      %v176 = vld [vmem:[%s144 + $0x58] sm:$0xff]
      %v177 = vld [vmem:[%s144 + $0x60] sm:$0xff]
      %v178 = vld [vmem:[%s144 + $0x68] sm:$0xff]
      %v179 = vld [vmem:[%s144 + $0x70] sm:$0xff]
      %v180 = vld [vmem:[%s144 + $0x78] sm:$0xff]
      %v181 = vld [vmem:[%s144 + $0x80] sm:$0xff]
      %v182 = vld [vmem:[%s144 + $0x88] sm:$0xff]
      %v183 = vld [vmem:[%s144 + $0x90] sm:$0xff]
      %v184 = vld [vmem:[%s144 + $0x98] sm:$0xff]
      %v185 = vld [vmem:[%s144 + $0xa0] sm:$0xff]
      %v186 = vld [vmem:[%s144 + $0xa8] sm:$0xff]
      %v187 = vld [vmem:[%s144 + $0xb0] sm:$0xff]
      %v188 = vld [vmem:[%s144 + $0xb8] sm:$0xff]
      %v189 = vld [vmem:[%s144 + $0xc0] sm:$0xff]
      %v190 = vld [vmem:[%s144 + $0xc8] sm:$0xff]
      %v191 = vld [vmem:[%s144 + $0xd0] sm:$0xff]
      %v192 = vld [vmem:[%s144 + $0xd8] sm:$0xff]
      %v193 = vld [vmem:[%s144 + $0xe0] sm:$0xff]
      %v194 = vld [vmem:[%s144 + $0xe8] sm:$0xff]
      %v195 = vld [vmem:[%s144 + $0xf0] sm:$0xff]
      %v196 = vld [vmem:[%s144 + $0xf8] sm:$0xff]
      %v197 = vld [vmem:[%s144 + $0x100] sm:$0xff]
      %v198 = vld [vmem:[%s144 + $0x108] sm:$0xff]
      %v199 = vld [vmem:[%s144 + $0x110] sm:$0xff]
      %v200 = vld [vmem:[%s144 + $0x118] sm:$0xff]
      %v201 = vld [vmem:[%s144 + $0x120] sm:$0xff]
      %v202 = vld [vmem:[%s144 + $0x128] sm:$0xff]
      %v203 = vld [vmem:[%s144 + $0x130] sm:$0xff]
      %v204 = vld [vmem:[%s144 + $0x138] sm:$0xff]
      %v205 = vld [vmem:[%s144 + $0x140] sm:$0x1f]
      %v206 = vld [vmem:[%s144 + $0x148] sm:$0x1f]
      %v207 = vld [vmem:[%s144 + $0x150] sm:$0x1f]
      %v208 = vld [vmem:[%s144 + $0x158] sm:$0x1f]
      %v210 = vlaneseq
      %v211 = vshrl.u32 %v210, 7
      %v212 = vsub.s32 0, %v211
      %v213 = vrot.slane %v164, %v212
      %v214 = vlaneseq
      %v215 = vshrl.u32 %v214, 7
      %v216 = vsub.s32 1, %v215
      %v217 = vrot.slane %v164, %v216
      %v218 = vlaneseq
      %v219 = vshrl.u32 %v218, 7
      %v220 = vsub.s32 2, %v219
      %v221 = vrot.slane %v164, %v220
      %v222 = vlaneseq
      %v223 = vshrl.u32 %v222, 7
      %v224 = vsub.s32 3, %v223
      %v225 = vrot.slane %v164, %v224
      %v230 = vmul.f32 %v165, %v213
      %v231 = vmul.f32 %v166, %v217
      %v232 = vmul.f32 %v167, %v221
      %v233 = vmul.f32 %v168, %v225
      %v234 = vmul.f32 %v169, %v213
      %v235 = vmul.f32 %v170, %v217
      %v236 = vmul.f32 %v171, %v221
      %v237 = vmul.f32 %v172, %v225
      %v238 = vmul.f32 %v173, %v213
      %v239 = vmul.f32 %v174, %v217
      %v240 = vmul.f32 %v175, %v221
      %v241 = vmul.f32 %v176, %v225
      %v242 = vmul.f32 %v177, %v213
      %v243 = vmul.f32 %v178, %v217
      %v244 = vmul.f32 %v179, %v221
      %v245 = vmul.f32 %v180, %v225
      %v246 = vmul.f32 %v181, %v213
      %v247 = vmul.f32 %v182, %v217
      %v248 = vmul.f32 %v183, %v221
      %v249 = vmul.f32 %v184, %v225
      %v250 = vmul.f32 %v185, %v213
      %v251 = vmul.f32 %v186, %v217
      %v252 = vmul.f32 %v187, %v221
      %v253 = vmul.f32 %v188, %v225
      %v254 = vmul.f32 %v189, %v213
      %v255 = vmul.f32 %v190, %v217
      %v256 = vmul.f32 %v191, %v221
      %v257 = vmul.f32 %v192, %v225
      %v258 = vmul.f32 %v193, %v213
      %v259 = vmul.f32 %v194, %v217
      %v260 = vmul.f32 %v195, %v221
      %v261 = vmul.f32 %v196, %v225
      %v262 = vmul.f32 %v197, %v213
      %v263 = vmul.f32 %v198, %v217
      %v264 = vmul.f32 %v199, %v221
      %v265 = vmul.f32 %v200, %v225
      %v266 = vmul.f32 %v201, %v213
      %v267 = vmul.f32 %v202, %v217
      %v268 = vmul.f32 %v203, %v221
      %v269 = vmul.f32 %v204, %v225
      %v270 = vmul.f32 %v205, %v213
      %v271 = vmul.f32 %v206, %v217
      %v272 = vmul.f32 %v207, %v221
      %v273 = vmul.f32 %v208, %v225
      %v274 = vmul.f32 %v160, 0.5
      %v275 = vmul.f32 %v162, 0.5
      %v276 = vsub.f32 %v156, %v274
      %v277 = vsub.f32 %v158, %v275
      %v278 = vadd.f32 %v156, %v274
      %v279 = vadd.f32 %v158, %v275
      %vm280 = vcmask 1047557
      %v281 = vsel %vm280, %v230, -inf
      %v282 = vmax.f32 %v281, %v234
      %v283 = vmax.f32 %v282, %v238
      %v284 = vmax.f32 %v283, %v242
      %v285 = vmax.f32 %v284, %v246
      %v286 = vmax.f32 %v285, %v250
      %v287 = vmax.f32 %v286, %v254
      %v288 = vmax.f32 %v287, %v258
      %v289 = vmax.f32 %v288, %v262
      %v290 = vmax.f32 %v289, %v266
      %vm291 = vcmask 1044480
      %v292 = vsel %vm291, %v270, -inf
      %v293 = vmax.f32 %v290, %v292
      %v294 = vrot.slane %v293, 4
      %v295 = vmax.f32 %v293, %v294
      %v296 = vrot.slane %v295, 2
      %v297 = vmax.f32 %v295, %v296
      %v298 = vrot.slane %v297, 1
      %v299 = vmax.f32 %v297, %v298
      %v300 = vsel %vm280, %v231, -inf
      %v301 = vmax.f32 %v300, %v235
      %v302 = vmax.f32 %v301, %v239
      %v303 = vmax.f32 %v302, %v243
      %v304 = vmax.f32 %v303, %v247
      %v305 = vmax.f32 %v304, %v251
      %v306 = vmax.f32 %v305, %v255
      %v307 = vmax.f32 %v306, %v259
      %v308 = vmax.f32 %v307, %v263
      %v309 = vmax.f32 %v308, %v267
      %v310 = vsel %vm291, %v271, -inf
      %v311 = vmax.f32 %v309, %v310
      %v312 = vrot.slane %v311, 4
      %v313 = vmax.f32 %v311, %v312
      %v314 = vrot.slane %v313, 2
      %v315 = vmax.f32 %v313, %v314
      %v316 = vrot.slane %v315, 1
      %v317 = vmax.f32 %v315, %v316
      %v318 = vsel %vm280, %v232, -inf
      %v319 = vmax.f32 %v318, %v236
      %v320 = vmax.f32 %v319, %v240
      %v321 = vmax.f32 %v320, %v244
      %v322 = vmax.f32 %v321, %v248
      %v323 = vmax.f32 %v322, %v252
      %v324 = vmax.f32 %v323, %v256
      %v325 = vmax.f32 %v324, %v260
      %v326 = vmax.f32 %v325, %v264
      %v327 = vmax.f32 %v326, %v268
      %v328 = vsel %vm291, %v272, -inf
      %v329 = vmax.f32 %v327, %v328
      %v330 = vrot.slane %v329, 4
      %v331 = vmax.f32 %v329, %v330
      %v332 = vrot.slane %v331, 2
      %v333 = vmax.f32 %v331, %v332
      %v334 = vrot.slane %v333, 1
      %v335 = vmax.f32 %v333, %v334
      %v336 = vsel %vm280, %v233, -inf
      %v337 = vmax.f32 %v336, %v237
      %v338 = vmax.f32 %v337, %v241
      %v339 = vmax.f32 %v338, %v245
      %v340 = vmax.f32 %v339, %v249
      %v341 = vmax.f32 %v340, %v253
      %v342 = vmax.f32 %v341, %v257
      %v343 = vmax.f32 %v342, %v261
      %v344 = vmax.f32 %v343, %v265
      %v345 = vmax.f32 %v344, %v269
      %v346 = vsel %vm291, %v273, -inf
      %v347 = vmax.f32 %v345, %v346
      %v348 = vrot.slane %v347, 4
      %v349 = vmax.f32 %v347, %v348
      %v350 = vrot.slane %v349, 2
      %v351 = vmax.f32 %v349, %v350
      %v352 = vrot.slane %v351, 1
      %v353 = vmax.f32 %v351, %v352
      %v354 = vlaneseq
      %v355 = vshrl.u32 %v354, 7
      %v356 = vadd.s32 %v355, 8
      %v357 = vadd.s32 %v355, 16
      %v358 = vadd.s32 %v355, 24
      %v359 = vadd.s32 %v355, 32
      %v360 = vadd.s32 %v355, 40
      %v361 = vadd.s32 %v355, 48
      %v362 = vadd.s32 %v355, 56
      %v363 = vadd.s32 %v355, 64
      %v364 = vadd.s32 %v355, 72
      %vm365 = vcmp.eq.f32.partialorder %v230, %v299
      %vm366 = vcmp.eq.f32.partialorder %v231, %v317
      %vm367 = vcmp.eq.f32.partialorder %v232, %v335
      %vm368 = vcmp.eq.f32.partialorder %v233, %v353
      %vm369 = vcmp.eq.f32.partialorder %v234, %v299
      %vm370 = vcmp.eq.f32.partialorder %v235, %v317
      %vm371 = vcmp.eq.f32.partialorder %v236, %v335
      %vm372 = vcmp.eq.f32.partialorder %v237, %v353
      %vm373 = vcmp.eq.f32.partialorder %v238, %v299
      %vm374 = vcmp.eq.f32.partialorder %v239, %v317
      %vm375 = vcmp.eq.f32.partialorder %v240, %v335
      %vm376 = vcmp.eq.f32.partialorder %v241, %v353
      %vm377 = vcmp.eq.f32.partialorder %v242, %v299
      %vm378 = vcmp.eq.f32.partialorder %v243, %v317
      %vm379 = vcmp.eq.f32.partialorder %v244, %v335
      %vm380 = vcmp.eq.f32.partialorder %v245, %v353
      %vm381 = vcmp.eq.f32.partialorder %v246, %v299
      %vm382 = vcmp.eq.f32.partialorder %v247, %v317
      %vm383 = vcmp.eq.f32.partialorder %v248, %v335
      %vm384 = vcmp.eq.f32.partialorder %v249, %v353
      %vm385 = vcmp.eq.f32.partialorder %v250, %v299
      %vm386 = vcmp.eq.f32.partialorder %v251, %v317
      %vm387 = vcmp.eq.f32.partialorder %v252, %v335
      %vm388 = vcmp.eq.f32.partialorder %v253, %v353
      %vm389 = vcmp.eq.f32.partialorder %v254, %v299
      %vm390 = vcmp.eq.f32.partialorder %v255, %v317
      %vm391 = vcmp.eq.f32.partialorder %v256, %v335
      %vm392 = vcmp.eq.f32.partialorder %v257, %v353
      %vm393 = vcmp.eq.f32.partialorder %v258, %v299
      %vm394 = vcmp.eq.f32.partialorder %v259, %v317
      %vm395 = vcmp.eq.f32.partialorder %v260, %v335
      %vm396 = vcmp.eq.f32.partialorder %v261, %v353
      %vm397 = vcmp.eq.f32.partialorder %v262, %v299
      %vm398 = vcmp.eq.f32.partialorder %v263, %v317
      %vm399 = vcmp.eq.f32.partialorder %v264, %v335
      %vm400 = vcmp.eq.f32.partialorder %v265, %v353
      %vm401 = vcmp.eq.f32.partialorder %v266, %v299
      %vm402 = vcmp.eq.f32.partialorder %v267, %v317
      %vm403 = vcmp.eq.f32.partialorder %v268, %v335
      %vm404 = vcmp.eq.f32.partialorder %v269, %v353
      %vm405 = vcmp.eq.f32.partialorder %v270, %v299
      %vm406 = vcmp.eq.f32.partialorder %v271, %v317
      %vm407 = vcmp.eq.f32.partialorder %v272, %v335
      %vm408 = vcmp.eq.f32.partialorder %v273, %v353
      %v409 = vrot.slane %v355, 3
      %v410 = vrot.slane %v356, 3
      %v411 = vsel %vm291, %v409, %v410
      %v412 = vrot.slane %v357, 3
      %v413 = vsel %vm291, %v410, %v412
      %v414 = vrot.slane %v358, 3
      %v415 = vsel %vm291, %v412, %v414
      %v416 = vrot.slane %v359, 3
      %v417 = vsel %vm291, %v414, %v416
      %v418 = vrot.slane %v360, 3
      %v419 = vsel %vm291, %v416, %v418
      %v420 = vrot.slane %v361, 3
      %v421 = vsel %vm291, %v418, %v420
      %v422 = vrot.slane %v362, 3
      %v423 = vsel %vm291, %v420, %v422
      %v424 = vrot.slane %v363, 3
      %v425 = vsel %vm291, %v422, %v424
      %v426 = vrot.slane %v364, 3
      %v427 = vsel %vm291, %v424, %v426
      %v428 = vsel %vm365, %v409, 80
      %v429 = vsel %vm366, %v409, 80
      %v430 = vsel %vm367, %v409, 80
      %v431 = vsel %vm368, %v409, 80
      %v432 = vsel %vm369, %v411, 80
      %v433 = vsel %vm370, %v411, 80
      %v434 = vsel %vm371, %v411, 80
      %v435 = vsel %vm372, %v411, 80
      %v436 = vsel %vm373, %v413, 80
      %v437 = vsel %vm374, %v413, 80
      %v438 = vsel %vm375, %v413, 80
      %v439 = vsel %vm376, %v413, 80
      %v440 = vsel %vm377, %v415, 80
      %v441 = vsel %vm378, %v415, 80
      %v442 = vsel %vm379, %v415, 80
      %v443 = vsel %vm380, %v415, 80
      %v444 = vsel %vm381, %v417, 80
      %v445 = vsel %vm382, %v417, 80
      %v446 = vsel %vm383, %v417, 80
      %v447 = vsel %vm384, %v417, 80
      %v448 = vsel %vm385, %v419, 80
      %v449 = vsel %vm386, %v419, 80
      %v450 = vsel %vm387, %v419, 80
      %v451 = vsel %vm388, %v419, 80
      %v452 = vsel %vm389, %v421, 80
      %v453 = vsel %vm390, %v421, 80
      %v454 = vsel %vm391, %v421, 80
      %v455 = vsel %vm392, %v421, 80
      %v456 = vsel %vm393, %v423, 80
      %v457 = vsel %vm394, %v423, 80
      %v458 = vsel %vm395, %v423, 80
      %v459 = vsel %vm396, %v423, 80
      %v460 = vsel %vm397, %v425, 80
      %v461 = vsel %vm398, %v425, 80
      %v462 = vsel %vm399, %v425, 80
      %v463 = vsel %vm400, %v425, 80
      %v464 = vsel %vm401, %v427, 80
      %v465 = vsel %vm402, %v427, 80
      %v466 = vsel %vm403, %v427, 80
      %v467 = vsel %vm404, %v427, 80
      %v468 = vsel %vm405, %v426, 80
      %v469 = vsel %vm406, %v426, 80
      %v470 = vsel %vm407, %v426, 80
      %v471 = vsel %vm408, %v426, 80
      %v472 = vsel %vm280, %v428, 2147483647
      %vm473 = vcmp.lt.s32.totalorder %v472, %v432
      %v474 = vsel %vm473, %v472, %v432
      %vm475 = vcmp.lt.s32.totalorder %v474, %v436
      %v476 = vsel %vm475, %v474, %v436
      %vm477 = vcmp.lt.s32.totalorder %v476, %v440
      %v478 = vsel %vm477, %v476, %v440
      %vm479 = vcmp.lt.s32.totalorder %v478, %v444
      %v480 = vsel %vm479, %v478, %v444
      %vm481 = vcmp.lt.s32.totalorder %v480, %v448
      %v482 = vsel %vm481, %v480, %v448
      %vm483 = vcmp.lt.s32.totalorder %v482, %v452
      %v484 = vsel %vm483, %v482, %v452
      %vm485 = vcmp.lt.s32.totalorder %v484, %v456
      %v486 = vsel %vm485, %v484, %v456
      %vm487 = vcmp.lt.s32.totalorder %v486, %v460
      %v488 = vsel %vm487, %v486, %v460
      %vm489 = vcmp.lt.s32.totalorder %v488, %v464
      %v490 = vsel %vm489, %v488, %v464
      %v491 = vsel %vm291, %v468, 2147483647
      %vm492 = vcmp.lt.s32.totalorder %v490, %v491
      %v493 = vsel %vm492, %v490, %v491
      %v494 = vrot.slane %v493, 4
      %vm495 = vcmp.lt.s32.totalorder %v493, %v494
      %v496 = vsel %vm495, %v493, %v494
      %v497 = vrot.slane %v496, 2
      %vm498 = vcmp.lt.s32.totalorder %v496, %v497
      %v499 = vsel %vm498, %v496, %v497
      %v500 = vrot.slane %v499, 1
      %vm501 = vcmp.lt.s32.totalorder %v499, %v500
      %v502 = vsel %vm501, %v499, %v500
      %v503 = vsel %vm280, %v429, 2147483647
      %vm504 = vcmp.lt.s32.totalorder %v503, %v433
      %v505 = vsel %vm504, %v503, %v433
      %vm506 = vcmp.lt.s32.totalorder %v505, %v437
      %v507 = vsel %vm506, %v505, %v437
      %vm508 = vcmp.lt.s32.totalorder %v507, %v441
      %v509 = vsel %vm508, %v507, %v441
      %vm510 = vcmp.lt.s32.totalorder %v509, %v445
      %v511 = vsel %vm510, %v509, %v445
      %vm512 = vcmp.lt.s32.totalorder %v511, %v449
      %v513 = vsel %vm512, %v511, %v449
      %vm514 = vcmp.lt.s32.totalorder %v513, %v453
      %v515 = vsel %vm514, %v513, %v453
      %vm516 = vcmp.lt.s32.totalorder %v515, %v457
      %v517 = vsel %vm516, %v515, %v457
      %vm518 = vcmp.lt.s32.totalorder %v517, %v461
      %v519 = vsel %vm518, %v517, %v461
      %vm520 = vcmp.lt.s32.totalorder %v519, %v465
      %v521 = vsel %vm520, %v519, %v465
      %v522 = vsel %vm291, %v469, 2147483647
      %vm523 = vcmp.lt.s32.totalorder %v521, %v522
      %v524 = vsel %vm523, %v521, %v522
      %v525 = vrot.slane %v524, 4
      %vm526 = vcmp.lt.s32.totalorder %v524, %v525
      %v527 = vsel %vm526, %v524, %v525
      %v528 = vrot.slane %v527, 2
      %vm529 = vcmp.lt.s32.totalorder %v527, %v528
      %v530 = vsel %vm529, %v527, %v528
      %v531 = vrot.slane %v530, 1
      %vm532 = vcmp.lt.s32.totalorder %v530, %v531
      %v533 = vsel %vm532, %v530, %v531
      %v534 = vsel %vm280, %v430, 2147483647
      %vm535 = vcmp.lt.s32.totalorder %v534, %v434
      %v536 = vsel %vm535, %v534, %v434
      %vm537 = vcmp.lt.s32.totalorder %v536, %v438
      %v538 = vsel %vm537, %v536, %v438
      %vm539 = vcmp.lt.s32.totalorder %v538, %v442
      %v540 = vsel %vm539, %v538, %v442
      %vm541 = vcmp.lt.s32.totalorder %v540, %v446
      %v542 = vsel %vm541, %v540, %v446
      %vm543 = vcmp.lt.s32.totalorder %v542, %v450
      %v544 = vsel %vm543, %v542, %v450
      %vm545 = vcmp.lt.s32.totalorder %v544, %v454
      %v546 = vsel %vm545, %v544, %v454
      %vm547 = vcmp.lt.s32.totalorder %v546, %v458
      %v548 = vsel %vm547, %v546, %v458
      %vm549 = vcmp.lt.s32.totalorder %v548, %v462
      %v550 = vsel %vm549, %v548, %v462
      %vm551 = vcmp.lt.s32.totalorder %v550, %v466
      %v552 = vsel %vm551, %v550, %v466
      %v553 = vsel %vm291, %v470, 2147483647
      %vm554 = vcmp.lt.s32.totalorder %v552, %v553
      %v555 = vsel %vm554, %v552, %v553
      %v556 = vrot.slane %v555, 4
      %vm557 = vcmp.lt.s32.totalorder %v555, %v556
      %v558 = vsel %vm557, %v555, %v556
      %v559 = vrot.slane %v558, 2
      %vm560 = vcmp.lt.s32.totalorder %v558, %v559
      %v561 = vsel %vm560, %v558, %v559
      %v562 = vrot.slane %v561, 1
      %vm563 = vcmp.lt.s32.totalorder %v561, %v562
      %v564 = vsel %vm563, %v561, %v562
      %v565 = vsel %vm280, %v431, 2147483647
      %vm566 = vcmp.lt.s32.totalorder %v565, %v435
      %v567 = vsel %vm566, %v565, %v435
      %vm568 = vcmp.lt.s32.totalorder %v567, %v439
      %v569 = vsel %vm568, %v567, %v439
      %vm570 = vcmp.lt.s32.totalorder %v569, %v443
      %v571 = vsel %vm570, %v569, %v443
      %vm572 = vcmp.lt.s32.totalorder %v571, %v447
      %v573 = vsel %vm572, %v571, %v447
      %vm574 = vcmp.lt.s32.totalorder %v573, %v451
      %v575 = vsel %vm574, %v573, %v451
      %vm576 = vcmp.lt.s32.totalorder %v575, %v455
      %v577 = vsel %vm576, %v575, %v455
      %vm578 = vcmp.lt.s32.totalorder %v577, %v459
      %v579 = vsel %vm578, %v577, %v459
      %vm580 = vcmp.lt.s32.totalorder %v579, %v463
      %v581 = vsel %vm580, %v579, %v463
      %vm582 = vcmp.lt.s32.totalorder %v581, %v467
      %v583 = vsel %vm582, %v581, %v467
      %v584 = vsel %vm291, %v471, 2147483647
      %vm585 = vcmp.lt.s32.totalorder %v583, %v584
      %v586 = vsel %vm585, %v583, %v584
      %v587 = vrot.slane %v586, 4
      %vm588 = vcmp.lt.s32.totalorder %v586, %v587
      %v589 = vsel %vm588, %v586, %v587
      %v590 = vrot.slane %v589, 2
      %vm591 = vcmp.lt.s32.totalorder %v589, %v590
      %v592 = vsel %vm591, %v589, %v590
      %v593 = vrot.slane %v592, 1
      %vm594 = vcmp.lt.s32.totalorder %v592, %v593
      %v595 = vsel %vm594, %v592, %v593
      %v596 = vcvt.s32.f32 %v502
      %v597 = vcvt.s32.f32 %v533
      %v598 = vcvt.s32.f32 %v564
      %v599 = vcvt.s32.f32 %v595
      %v601 = vlaneseq
      %v602 = vshrl.u32 %v601, 7
      %v603 = vsub.s32 0, %v602
      %v604 = vrot.slane %v276, %v603
      %v605 = vlaneseq
      %v606 = vshrl.u32 %v605, 7
      %v607 = vsub.s32 1, %v606
      %v608 = vrot.slane %v276, %v607
      %v609 = vlaneseq
      %v610 = vshrl.u32 %v609, 7
      %v611 = vsub.s32 2, %v610
      %v612 = vrot.slane %v276, %v611
      %v613 = vlaneseq
      %v614 = vshrl.u32 %v613, 7
      %v615 = vsub.s32 3, %v614
      %v616 = vrot.slane %v276, %v615
      %v622 = vlaneseq
      %v623 = vshrl.u32 %v622, 7
      %v624 = vsub.s32 0, %v623
      %v625 = vrot.slane %v277, %v624
      %v626 = vlaneseq
      %v627 = vshrl.u32 %v626, 7
      %v628 = vsub.s32 1, %v627
      %v629 = vrot.slane %v277, %v628
      %v630 = vlaneseq
      %v631 = vshrl.u32 %v630, 7
      %v632 = vsub.s32 2, %v631
      %v633 = vrot.slane %v277, %v632
      %v634 = vlaneseq
      %v635 = vshrl.u32 %v634, 7
      %v636 = vsub.s32 3, %v635
      %v637 = vrot.slane %v277, %v636
      %v643 = vlaneseq
      %v644 = vshrl.u32 %v643, 7
      %v645 = vsub.s32 0, %v644
      %v646 = vrot.slane %v278, %v645
      %v647 = vlaneseq
      %v648 = vshrl.u32 %v647, 7
      %v649 = vsub.s32 1, %v648
      %v650 = vrot.slane %v278, %v649
      %v651 = vlaneseq
      %v652 = vshrl.u32 %v651, 7
      %v653 = vsub.s32 2, %v652
      %v654 = vrot.slane %v278, %v653
      %v655 = vlaneseq
      %v656 = vshrl.u32 %v655, 7
      %v657 = vsub.s32 3, %v656
      %v658 = vrot.slane %v278, %v657
      %v664 = vlaneseq
      %v665 = vshrl.u32 %v664, 7
      %v666 = vsub.s32 0, %v665
      %v667 = vrot.slane %v279, %v666
      %v668 = vlaneseq
      %v669 = vshrl.u32 %v668, 7
      %v670 = vsub.s32 1, %v669
      %v671 = vrot.slane %v279, %v670
      %v672 = vlaneseq
      %v673 = vshrl.u32 %v672, 7
      %v674 = vsub.s32 2, %v673
      %v675 = vrot.slane %v279, %v674
      %v676 = vlaneseq
      %v677 = vshrl.u32 %v676, 7
      %v678 = vsub.s32 3, %v677
      %v679 = vrot.slane %v279, %v678
      %vm684 = vcmask 1040384
      %v685 = vsel %vm684, %v604, %v625
      %v686 = vsel %vm684, %v608, %v629
      %v687 = vsel %vm684, %v612, %v633
      %v688 = vsel %vm684, %v616, %v637
      %vm689 = vcmask 1041408
      %v690 = vsel %vm689, %v685, %v646
      %v691 = vsel %vm689, %v686, %v650
      %v692 = vsel %vm689, %v687, %v654
      %v693 = vsel %vm689, %v688, %v658
      %vm694 = vcmask 1042432
      %v695 = vsel %vm694, %v690, %v667
      %v696 = vsel %vm694, %v691, %v671
      %v697 = vsel %vm694, %v692, %v675
      %v698 = vsel %vm694, %v693, %v679
      %vm699 = vcmask 1043456
      %v700 = vsel %vm699, %v695, %v299
      %v701 = vsel %vm699, %v696, %v317
      %v702 = vsel %vm699, %v697, %v335
      %v703 = vsel %vm699, %v698, %v353
      %v704 = vsel %vm291, %v700, %v596
      %v705 = vsel %vm291, %v701, %v597
      %v706 = vsel %vm291, %v702, %v598
      %v707 = vsel %vm291, %v703, %v599
      %708 = vst [vmem:[%s154] sm:$0x3f] %v704
      %709 = vst [vmem:[%s154 + $0x8] sm:$0x3f] %v705
      %710 = vst [vmem:[%s154 + $0x10] sm:$0x3f] %v706
      %711 = vst [vmem:[%s154 + $0x18] sm:$0x3f] %v707
      %s712 = smul.u32 4, %s17
      %p713 = scmp.lt.s32.totalorder %s16, 1
      %s714 = scalar_select %p713, %s16, 1
      %p715 = scmp.lt.s32.totalorder %s712, 3
      %s716 = scalar_select %p715, %s712, 3
      %s717 = smul.addr %s714, 4
      %s718 = sadd.s32 %s716, %s717
      %s719 = smul.addr %s718, 8
      %s720 = scalar_lea.vmem %s1, %s719
      // Predicated region
      $region25: #{onnx_trt_forward.2} parent=23 // pred_check
        %p721 = pneg %p72
      $region26: #{onnx_trt_forward.2} parent=23 // pred_check_branch
        %723 = sbr.rel (%p721) target = $region28
      $region27: #{onnx_trt_forward.2} parent=23 // pred_region
        %s724 = smul.u32 4, %s17
      $region28: #{onnx_trt_forward.2} parent=23 // pred_fallthru
        _
    $region24: #{onnx_trt_forward.2} parent=5 // pred_fallthru
      _
    %p725 = scmp.le.s32.totalorder 2, %s7
    // Predicated region
    $region29: #{onnx_trt_forward.2} parent=5 // pred_check
      %p726 = pneg %p725
    $region30: #{onnx_trt_forward.2} parent=5 // pred_check_branch
      %728 = sbr.rel (%p726) target = $region32
    $region31: #{onnx_trt_forward.2} parent=5 // pred_region
      %s729 = ssub.s32 %s7, 2
      // Predicated region
      $region33: #{onnx_trt_forward.2} parent=31 // pred_check
        %p730 = pneg %p78
      $region34: #{onnx_trt_forward.2} parent=31 // pred_check_branch
        %732 = sbr.rel (%p730) target = $region36
      $region35: #{onnx_trt_forward.2} parent=31 // pred_region
        %s733 = smul.u32 4, %s19
        %p734 = scmp.lt.s32.totalorder %s18, 1
        %s735 = scalar_select %p734, %s18, 1
        %p736 = scmp.lt.s32.totalorder %s733, 3
        %s737 = scalar_select %p736, %s733, 3
        %s738 = smul.addr %s735, 4
        %s739 = sadd.s32 %s737, %s738
        %s740 = smul.addr %s739, 8
        %s741 = scalar_lea.vmem %s1, %s740
      $region36: #{onnx_trt_forward.2} parent=31 // pred_fallthru
        _
    $region32: #{onnx_trt_forward.2} parent=5 // pred_fallthru
      _
  $region6: #{onnx_trt_forward.2} parent=0 // loop_footer
    %s11 = sadd.s32 1, %s7
  $region7: #{onnx_trt_forward.2} parent=0 // loop_footer_branch
    %6 = sbr.rel target = $region3
  $region8: #{onnx_trt_forward.2} parent=0 // loop_exit
    _

// kernel: onnx_trt_forward.3
$region0: #{onnx_trt_forward.3}
  #allocation0 [shape = 'u32[]', space=smem, size = 0x4, offset = 0x4, fixed_abs, tag = 'smem constant byte address 0x4 - core index']
  #allocation1 [shape = 'u32[144,128]{1,0:T(1,128)}', space=vmem, size = 0x12000, scoped, tag = 'internal scratch']
  %s0 = inlined_call_operand.vmem [shape: bf16[2,100,32], index: 0, kind: input, shape index: {}]
  %s1 = inlined_call_operand.vmem [shape: bf16[2,32,256], index: 1, kind: input, shape index: {}]
  %s2 = inlined_call_operand.vmem [shape: f32[2,100,4], index: 2, kind: input, shape index: {}]
  %s3 = inlined_call_operand.vmem [shape: f32[2,256], index: 3, kind: input, shape index: {}]
  %s4 = inlined_call_operand.vmem [shape: f32[2,100,256], index: 4, kind: output, shape index: {}]
  %s5 = sld [smem:[#allocation0]]
  $region49: #{onnx_trt_forward.3} parent=0
    _
  %s7 = ssub.s32 1, %s5
  %s8 = scalar_select 0, %s7, %s5
  loop: start=0, step=1, limit=4
  $region2: #{onnx_trt_forward.3} parent=0 // loop_pre_header
    _
  $region3: #{onnx_trt_forward.3} parent=0 // loop_header
    %s10 = sphi 0, %s14
    %p11 = scmp.ge.s32.totalorder %s10, 4
    %s17 = sphi 0, %s29
    %s18 = sphi 0, %s25
    %s19 = sphi 0, %s17
    %s20 = sphi 0, %s18
    %s21 = sphi 0, %s19
    %s22 = sphi 0, %s20
    %s32 = sphi 0, %s34
    %s35 = sphi 0, %s32
    %s36 = sphi 0, %s35
    %s52 = sphi 0, %s36
    %s60 = sphi 0, %s62
    %s63 = sphi 0, %s60
    %s64 = sphi 0, %s63
    %s80 = sphi 0, %s64
    %s86 = sphi 0, %s88
    %s89 = sphi 0, %s86
    %s90 = sphi 0, %s89
    %s106 = sphi 0, %s90
    %s112 = sphi 0, %s114
    %s115 = sphi 0, %s112
    %s116 = sphi 0, %s115
    %s132 = sphi 0, %s116
    %s140 = sphi 0, %s142
    %s143 = sphi 0, %s140
    %s144 = sphi 0, %s143
    %s160 = sphi 0, %s144
  $region4: #{onnx_trt_forward.3} parent=0 // loop_header_branch
    %13 = sbr.rel (%p11) target = $region8
  $region5: #{onnx_trt_forward.3} parent=0 // loop_body
    %s15 = ssub.s32 %s10, 1
    %s16 = ssub.s32 %s10, 2
    %s23 = sadd.s32 1, %s18
    %p24 = scmp.ge.s32.totalorder %s23, 1
    %s25 = scalar_select %p24, 0, %s23
    %s26 = sadd.s32 1, %s17
    %s27 = scalar_select %p24, %s26, %s17
    %p28 = scmp.ge.s32.totalorder %s27, 2
    %s29 = scalar_select %p28, 0, %s27
    %s30 = ssub.s32 %s17, %s29
    %p31 = scmp.eq.s32.totalorder %s30, 0
    %s33 = sadd.s32 %s32, 1
    %s34 = scalar_select %p31, %s32, %s33
    %p37 = pneg %p31
    %p38 = scmp.eq.s32.totalorder %s10, 1
    %p39 = por %p37, %p38
    %p40 = scmp.ne.s32.totalorder %s32, %s35
    %p41 = scmp.eq.s32.totalorder %s10, 0
    %p42 = por %p40, %p41
    %p43 = scmp.ne.s32.totalorder %s32, %s35
    %p44 = scmp.eq.s32.totalorder %s15, 1
    %p45 = por %p43, %p44
    %p46 = scmp.ne.s32.totalorder %s35, %s36
    %p47 = scmp.eq.s32.totalorder %s15, 0
    %p48 = por %p46, %p47
    %p49 = scmp.ne.s32.totalorder %s35, %s36
    %p50 = scmp.eq.s32.totalorder %s16, 1
    %p51 = por %p49, %p50
    %p53 = scmp.ne.s32.totalorder %s36, %s52
    %p54 = scmp.eq.s32.totalorder %s16, 0
    %p55 = por %p53, %p54
    %s56 = ssub.s32 %s17, %s29
    %s57 = ssub.s32 %s18, %s25
    %s58 = sor.u32 %s56, %s57
    %p59 = scmp.eq.s32.totalorder %s58, 0
    %s61 = sadd.s32 %s60, 1
    %s62 = scalar_select %p59, %s60, %s61
    %p65 = pneg %p59
    %p66 = scmp.eq.s32.totalorder %s10, 1
    %p67 = por %p65, %p66
    %p68 = scmp.ne.s32.totalorder %s60, %s63
    %p69 = scmp.eq.s32.totalorder %s10, 0
    %p70 = por %p68, %p69
    %p71 = scmp.ne.s32.totalorder %s60, %s63
    %p72 = scmp.eq.s32.totalorder %s15, 1
    %p73 = por %p71, %p72
    %p74 = scmp.ne.s32.totalorder %s63, %s64
    %p75 = scmp.eq.s32.totalorder %s15, 0
    %p76 = por %p74, %p75
    %p77 = scmp.ne.s32.totalorder %s63, %s64
    %p78 = scmp.eq.s32.totalorder %s16, 1
    %p79 = por %p77, %p78
    %p81 = scmp.ne.s32.totalorder %s64, %s80
    %p82 = scmp.eq.s32.totalorder %s16, 0
    %p83 = por %p81, %p82
    %s84 = ssub.s32 %s17, %s29
    %p85 = scmp.eq.s32.totalorder %s84, 0
    %s87 = sadd.s32 %s86, 1
    %s88 = scalar_select %p85, %s86, %s87
    %p91 = pneg %p85
    %p92 = scmp.eq.s32.totalorder %s10, 1
    %p93 = por %p91, %p92
    %p94 = scmp.ne.s32.totalorder %s86, %s89
    %p95 = scmp.eq.s32.totalorder %s10, 0
    %p96 = por %p94, %p95
    %p97 = scmp.ne.s32.totalorder %s86, %s89
    %p98 = scmp.eq.s32.totalorder %s15, 1
    %p99 = por %p97, %p98
    %p100 = scmp.ne.s32.totalorder %s89, %s90
    %p101 = scmp.eq.s32.totalorder %s15, 0
    %p102 = por %p100, %p101
    %p103 = scmp.ne.s32.totalorder %s89, %s90
    %p104 = scmp.eq.s32.totalorder %s16, 1
    %p105 = por %p103, %p104
    %p107 = scmp.ne.s32.totalorder %s90, %s106
    %p108 = scmp.eq.s32.totalorder %s16, 0
    %p109 = por %p107, %p108
    %s110 = ssub.s32 %s18, %s25
    %p111 = scmp.eq.s32.totalorder %s110, 0
    %s113 = sadd.s32 %s112, 1
    %s114 = scalar_select %p111, %s112, %s113
    %p117 = pneg %p111
    %p118 = scmp.eq.s32.totalorder %s10, 1
    %p119 = por %p117, %p118
    %p120 = scmp.ne.s32.totalorder %s112, %s115
    %p121 = scmp.eq.s32.totalorder %s10, 0
    %p122 = por %p120, %p121
    %p123 = scmp.ne.s32.totalorder %s112, %s115
    %p124 = scmp.eq.s32.totalorder %s15, 1
    %p125 = por %p123, %p124
    %p126 = scmp.ne.s32.totalorder %s115, %s116
    %p127 = scmp.eq.s32.totalorder %s15, 0
    %p128 = por %p126, %p127
    %p129 = scmp.ne.s32.totalorder %s115, %s116
    %p130 = scmp.eq.s32.totalorder %s16, 1
    %p131 = por %p129, %p130
    %p133 = scmp.ne.s32.totalorder %s116, %s132
    %p134 = scmp.eq.s32.totalorder %s16, 0
    %p135 = por %p133, %p134
    %s136 = ssub.s32 %s17, %s29
    %s137 = ssub.s32 %s18, %s25
    %s138 = sor.u32 %s136, %s137
    %p139 = scmp.eq.s32.totalorder %s138, 0
    %s141 = sadd.s32 %s140, 1
    %s142 = scalar_select %p139, %s140, %s141
    %p145 = pneg %p139
    %p146 = scmp.eq.s32.totalorder %s10, 1
    %p147 = por %p145, %p146
    %p148 = scmp.ne.s32.totalorder %s140, %s143
    %p149 = scmp.eq.s32.totalorder %s10, 0
    %p150 = por %p148, %p149
    %p151 = scmp.ne.s32.totalorder %s140, %s143
    %p152 = scmp.eq.s32.totalorder %s15, 1
    %p153 = por %p151, %p152
    %p154 = scmp.ne.s32.totalorder %s143, %s144
    %p155 = scmp.eq.s32.totalorder %s15, 0
    %p156 = por %p154, %p155
    %p157 = scmp.ne.s32.totalorder %s143, %s144
    %p158 = scmp.eq.s32.totalorder %s16, 1
    %p159 = por %p157, %p158
    %p161 = scmp.ne.s32.totalorder %s144, %s160
    %p162 = scmp.eq.s32.totalorder %s16, 0
    %p163 = por %p161, %p162
    %p164 = scmp.le.s32.totalorder 1, %s10
    %p165 = scmp.lt.s32.totalorder %s10, 3
    %p166 = pnand %p164, %p165
    %p167 = pneg %p166
    // Predicated region
    $region9: #{onnx_trt_forward.3} parent=5 // pred_check
      _
    $region10: #{onnx_trt_forward.3} parent=5 // pred_check_branch
      %169 = sbr.rel (%p166) target = $region12
    $region11: #{onnx_trt_forward.3} parent=5 // pred_region
      %s170 = ssub.s32 %s10, 1
      // Predicated region
      $region13: #{onnx_trt_forward.3} parent=11 // pred_check
        %p171 = pneg %p128
      $region14: #{onnx_trt_forward.3} parent=11 // pred_check_branch
        %173 = sbr.rel (%p171) target = $region16
      $region15: #{onnx_trt_forward.3} parent=11 // pred_region
        %s174 = smul.u32 2, %s20
        %p175 = scmp.lt.s32.totalorder %s174, 1
        %s176 = scalar_select %p175, %s174, 1
        %s177 = smul.addr %s176, 2
        %s178 = scalar_lea.vmem %s3, %s177
        %s179 = smul.u32 2, %s20
      $region16: #{onnx_trt_forward.3} parent=11 // pred_fallthru
        _
    $region12: #{onnx_trt_forward.3} parent=5 // pred_fallthru
      _
    %p180 = scmp.lt.s32.totalorder %s10, 2
    // Predicated region
    $region17: #{onnx_trt_forward.3} parent=5 // pred_check
      %p181 = pneg %p180
    $region18: #{onnx_trt_forward.3} parent=5 // pred_check_branch
      %183 = sbr.rel (%p181) target = $region20
    $region19: #{onnx_trt_forward.3} parent=5 // pred_region
      // Predicated region
      $region21: #{onnx_trt_forward.3} parent=19 // pred_check
        %p184 = pneg %p42
      $region22: #{onnx_trt_forward.3} parent=19 // pred_check_branch
        %186 = sbr.rel (%p184) target = $region24
      $region23: #{onnx_trt_forward.3} parent=19 // pred_region
        %p187 = scmp.lt.s32.totalorder %s17, 1
        %s188 = scalar_select %p187, %s17, 1
        %s189 = smul.addr %s188, 13
        %s190 = smul.addr %s189, 4
        %s191 = scalar_lea.vmem %s0, %s190
      $region24: #{onnx_trt_forward.3} parent=19 // pred_fallthru
        _
      // Predicated region
      $region25: #{onnx_trt_forward.3} parent=19 // pred_check
        %p192 = pneg %p70
      $region26: #{onnx_trt_forward.3} parent=19 // pred_check_branch
        %194 = sbr.rel (%p192) target = $region28
      $region27: #{onnx_trt_forward.3} parent=19 // pred_region
        %s195 = smul.u32 2, %s18
        %p196 = scmp.lt.s32.totalorder %s17, 1
        %s197 = scalar_select %p196, %s17, 1
        %p198 = scmp.lt.s32.totalorder %s195, 1
        %s199 = scalar_select %p198, %s195, 1
        %s200 = smul.addr %s197, 8
        %s201 = sadd.s32 %s199, %s200
        %s202 = smul.addr %s201, 4
        %s203 = scalar_lea.vmem %s1, %s202
        %s204 = smul.u32 2, %s18
      $region28: #{onnx_trt_forward.3} parent=19 // pred_fallthru
        _
      // Predicated region
      $region29: #{onnx_trt_forward.3} parent=19 // pred_check
        %p205 = pneg %p96
      $region30: #{onnx_trt_forward.3} parent=19 // pred_check_branch
        %207 = sbr.rel (%p205) target = $region32
      $region31: #{onnx_trt_forward.3} parent=19 // pred_region
        %p208 = scmp.lt.s32.totalorder %s17, 1
        %s209 = scalar_select %p208, %s17, 1
        %s210 = smul.addr %s209, 13
        %s211 = smul.addr %s210, 8
        %s212 = scalar_lea.vmem %s2, %s211
      $region32: #{onnx_trt_forward.3} parent=19 // pred_fallthru
        _
    $region20: #{onnx_trt_forward.3} parent=5 // pred_fallthru
      _
    %p213 = scmp.le.s32.totalorder 1, %s10
    %p214 = scmp.lt.s32.totalorder %s10, 3
    %p215 = pnand %p213, %p214
    %p216 = pneg %p215
    // Predicated region
    $region33: #{onnx_trt_forward.3} parent=5 // pred_check
      _
    $region34: #{onnx_trt_forward.3} parent=5 // pred_check_branch
      %218 = sbr.rel (%p215) target = $region36
    $region35: #{onnx_trt_forward.3} parent=5 // pred_region
      %s219 = ssub.s32 %s10, 1
      %p220 = scmp.lt.s32.totalorder %s19, 1
      %s221 = scalar_select %p220, %s19, 1
      %s222 = smul.addr %s221, 13
      %s223 = smul.addr %s222, 4
      %s224 = scalar_lea.vmem %s0, %s223
      %p225 = pneg %p48
      %p226 = pneg %p45
      %s227 = smul.u32 2, %s20
      %p228 = scmp.lt.s32.totalorder %s19, 1
      %s229 = scalar_select %p228, %s19, 1
      %p230 = scmp.lt.s32.totalorder %s227, 1
      %s231 = scalar_select %p230, %s227, 1
      %s232 = smul.addr %s229, 8
      %s233 = sadd.s32 %s231, %s232
      %s234 = smul.addr %s233, 4
      %s235 = scalar_lea.vmem %s1, %s234
      %p236 = pneg %p76
      %p237 = pneg %p73
      %p238 = scmp.lt.s32.totalorder %s19, 1
      %s239 = scalar_select %p238, %s19, 1
      %s240 = smul.addr %s239, 13
      %s241 = smul.addr %s240, 8
      %s242 = scalar_lea.vmem %s2, %s241
      %p243 = pneg %p102
      %p244 = pneg %p99
      %s245 = smul.u32 2, %s20
      %p246 = scmp.lt.s32.totalorder %s245, 1
      %s247 = scalar_select %p246, %s245, 1
      %s248 = smul.addr %s247, 2
      %s249 = scalar_lea.vmem %s3, %s248
      %p250 = pneg %p128
      %p251 = pneg %p125
      %p252 = pneg %p156
      %p253 = pneg %p153
      %s254 = smul.u32 2, %s20
      %p255 = scmp.lt.s32.totalorder %s19, 1
      %s256 = scalar_select %p255, %s19, 1
      %p257 = scmp.lt.s32.totalorder %s254, 1
      %s258 = scalar_select %p257, %s254, 1
      %s259 = smul.addr %s256, 26
      %s260 = sadd.s32 %s258, %s259
      %s261 = smul.addr %s260, 8
      %s262 = scalar_lea.vmem %s4, %s261
      %p263 = scmp.lt.s32.totalorder %s19, 1
      %s264 = scalar_select %p263, %s19, 1
      %s265 = smul.addr %s264, 13
      %s266 = smul.addr %s265, 4
      %s267 = scalar_lea.vmem %s0, %s266
      %s268 = smul.u32 2, %s20
      %p269 = scmp.lt.s32.totalorder %s19, 1
      %s270 = scalar_select %p269, %s19, 1
      %p271 = scmp.lt.s32.totalorder %s268, 1
      %s272 = scalar_select %p271, %s268, 1
      %s273 = smul.addr %s270, 8
      %s274 = sadd.s32 %s272, %s273
      %s275 = smul.addr %s274, 4
      %s276 = scalar_lea.vmem %s1, %s275
      %s277 = smul.u32 2, %s20
      %p278 = scmp.lt.s32.totalorder %s19, 1
      %s279 = scalar_select %p278, %s19, 1
      %s280 = smul.addr %s279, 13
      %s281 = smul.addr %s280, 8
      %s282 = scalar_lea.vmem %s2, %s281
      %s283 = smul.u32 2, %s20
      %p284 = scmp.lt.s32.totalorder %s283, 1
      %s285 = scalar_select %p284, %s283, 1
      %s286 = smul.addr %s285, 2
      %s287 = scalar_lea.vmem %s3, %s286
      %s288 = smul.u32 2, %s20
      %s289 = smul.u32 2, %s20
      %p290 = scmp.lt.s32.totalorder %s19, 1
      %s291 = scalar_select %p290, %s19, 1
      %p292 = scmp.lt.s32.totalorder %s289, 1
      %s293 = scalar_select %p292, %s289, 1
      %s294 = smul.addr %s291, 26
      %s295 = sadd.s32 %s293, %s294
      %s296 = smul.addr %s295, 8
      %s297 = scalar_lea.vmem %s4, %s296
      %s298 = smul.u32 2, %s20
      %v300 = vld [vmem:[%s267] sm:$0xf]
      %v301 = vld [vmem:[%s267 + $0x4] sm:$0xf]
      %v302 = vld [vmem:[%s267 + $0x8] sm:$0xf]
      %v303 = vld [vmem:[%s267 + $0xc] sm:$0xf]
      %v304 = vld [vmem:[%s267 + $0x10] sm:$0xf]
      %v305 = vld [vmem:[%s267 + $0x14] sm:$0xf]
      %v306 = vld [vmem:[%s267 + $0x18] sm:$0xf]
      %v307 = vld [vmem:[%s267 + $0x1c] sm:$0xf]
      %v308 = vld [vmem:[%s267 + $0x20] sm:$0xf]
      %v309 = vld [vmem:[%s267 + $0x24] sm:$0xf]
      %v310 = vld [vmem:[%s267 + $0x28] sm:$0xf]
      %v311 = vld [vmem:[%s267 + $0x2c] sm:$0xf]
      %v312 = vld [vmem:[%s267 + $0x30] sm:$0x3]
      %v313 = vld [vmem:[%s276] sm:$0xff]
      %v314 = vld [vmem:[%s276 + $0x8] sm:$0xff]
      %v315 = vld [vmem:[%s276 + $0x10] sm:$0xff]
      %v316 = vld [vmem:[%s276 + $0x18] sm:$0xff]
      %v330 = vunpack.c.l.b16 %v300
      %v331 = vunpack.c.l.b16 %v301
      %v332 = vunpack.c.l.b16 %v302
      %v333 = vunpack.c.l.b16 %v303
      %v334 = vunpack.c.l.b16 %v304
      %v335 = vunpack.c.l.b16 %v305
      %v336 = vunpack.c.l.b16 %v306
      %v337 = vunpack.c.l.b16 %v307
      %v338 = vunpack.c.l.b16 %v308
      %v339 = vunpack.c.l.b16 %v309
      %v340 = vunpack.c.l.b16 %v310
      %v341 = vunpack.c.l.b16 %v311
      %v342 = vunpack.c.l.b16 %v312
      %v343 = vpack.c.b16 %v331, %v330
      %v344 = vpack.c.b16 %v333, %v332
      %v345 = vpack.c.b16 %v335, %v334
      %v346 = vpack.c.b16 %v337, %v336
      %v347 = vpack.c.b16 %v339, %v338
      %v348 = vpack.c.b16 %v341, %v340
      %v349 = vpack.c.b16 %v342, %v342
      %v354 = vunpack.c.l.b16 %v313
      %v355 = vunpack.c.h.b16 %v313
      %v356 = vunpack.c.l.b16 %v314
      %v357 = vunpack.c.h.b16 %v314
      %v358 = vunpack.c.l.b16 %v315
      %v359 = vunpack.c.h.b16 %v315
      %v360 = vunpack.c.l.b16 %v316
      %v361 = vunpack.c.h.b16 %v316
      %v362 = vpack.c.b16 %v356, %v354
      %v363 = vpack.c.b16 %v357, %v355
      %v364 = vpack.c.b16 %v360, %v358
      %v365 = vpack.c.b16 %v361, %v359
      %vm370 = vcmask 261120
      %v372 = vsel %vm370, %v343, 0
      %v375 = vsel %vm370, %v344, 0
      %v378 = vsel %vm370, %v345, 0
      %v381 = vsel %vm370, %v346, 0
      %v384 = vsel %vm370, %v347, 0
      %v387 = vsel %vm370, %v348, 0
      %v390 = vsel %vm370, %v349, 0
      %392 = vmatprep.subr.bf16.mxu0 0
      %393 = vmatpush1.bf16.msra.mxu0 0
      %394 = vmatprep.subr.bf16.mxu0 0
      %395 = vmatpush1.bf16.msra.mxu0 0
      %396 = vmatprep.subr.bf16.mxu0 0
      %397 = vmatpush1.bf16.msra.mxu0 0
      %398 = vmatprep.subr.bf16.mxu0 0
      %399 = vmatpush1.bf16.msra.mxu0 0
      %400 = vmatprep.subr.bf16.mxu0 0
      %401 = vmatpush1.bf16.msra.mxu0 0
      %402 = vmatprep.subr.bf16.mxu0 0
      %403 = vmatpush1.bf16.msra.mxu0 0
      %404 = vmatprep.subr.bf16.mxu0 %v365
      %405 = vmatpush1.bf16.msra.mxu0 %v364
      %406 = vmatprep.subr.bf16.mxu0 %v363
      %407 = vmatpush1.bf16.msra.mxu0 %v362
      %408 = vmatprep.subr.bf16.mxu0 0
      %409 = vmatpush2.bf16.msra.mxu0 0
      %410 = vmatprep.subr.bf16.mxu0 0
      %411 = vmatpush2.bf16.msra.mxu0 0
      %412 = vmatprep.subr.bf16.mxu0 0
      %413 = vmatpush2.bf16.msra.mxu0 0
      %414 = vmatprep.subr.bf16.mxu0 0
      %415 = vmatpush2.bf16.msra.mxu0 0
      %416 = vmatprep.subr.bf16.mxu0 0
      %417 = vmatpush2.bf16.msra.mxu0 0
      %418 = vmatprep.subr.bf16.mxu0 0
      %419 = vmatpush2.bf16.msra.mxu0 0
      %420 = vmatprep.subr.bf16.mxu0 0
      %421 = vmatpush2.bf16.msra.mxu0 0
      %422 = vmatprep.subr.bf16.mxu0 0
      %423 = vmatpush2.bf16.msra.mxu0 0
      %424 = vmatprep.mubr.bf16.mxu0 0
      %425 = vmatmul.mubr.bf16.gmra.mxu0 %v372
      %v426 = vpop.f32.mrf.mxu0
      %v427 = vadd.f32 0.0, %v426
      %v428 = vpop.f32.mrf.mxu0
      %v429 = vadd.f32 0.0, %v428
      %v430 = vpop.f32.mrf.mxu0
      %v431 = vadd.f32 0.0, %v430
      %v432 = vpop.f32.mrf.mxu0
      %v433 = vadd.f32 0.0, %v432
      %434 = vmatprep.mubr.bf16.mxu0 0
      %435 = vmatmul.mubr.bf16.gmra.mxu0 %v375
      %v436 = vpop.f32.mrf.mxu0
      %v437 = vadd.f32 0.0, %v436
      %v438 = vpop.f32.mrf.mxu0
      %v439 = vadd.f32 0.0, %v438
      %v440 = vpop.f32.mrf.mxu0
      %v441 = vadd.f32 0.0, %v440
      %v442 = vpop.f32.mrf.mxu0
      %v443 = vadd.f32 0.0, %v442
      %444 = vmatprep.mubr.bf16.mxu0 0
      %445 = vmatmul.mubr.bf16.gmra.mxu0 %v378
      %v446 = vpop.f32.mrf.mxu0
      %v447 = vadd.f32 0.0, %v446
      %v448 = vpop.f32.mrf.mxu0
      %v449 = vadd.f32 0.0, %v448
      %v450 = vpop.f32.mrf.mxu0
      %v451 = vadd.f32 0.0, %v450
      %v452 = vpop.f32.mrf.mxu0
      %v453 = vadd.f32 0.0, %v452
      %454 = vmatprep.mubr.bf16.mxu0 0
      %455 = vmatmul.mubr.bf16.gmra.mxu0 %v381
      %v456 = vpop.f32.mrf.mxu0
      %v457 = vadd.f32 0.0, %v456
      %v458 = vpop.f32.mrf.mxu0
      %v459 = vadd.f32 0.0, %v458
      %v460 = vpop.f32.mrf.mxu0
      %v461 = vadd.f32 0.0, %v460
      %v462 = vpop.f32.mrf.mxu0
      %v463 = vadd.f32 0.0, %v462
      %464 = vmatprep.mubr.bf16.mxu0 0
      %465 = vmatmul.mubr.bf16.gmra.mxu0 %v384
      %v466 = vpop.f32.mrf.mxu0
      %v467 = vadd.f32 0.0, %v466
      %v468 = vpop.f32.mrf.mxu0
      %v469 = vadd.f32 0.0, %v468
      %v470 = vpop.f32.mrf.mxu0
      %v471 = vadd.f32 0.0, %v470
      %v472 = vpop.f32.mrf.mxu0
      %v473 = vadd.f32 0.0, %v472
      %474 = vmatprep.mubr.bf16.mxu0 0
      %475 = vmatmul.mubr.bf16.gmra.mxu0 %v387
      %v476 = vpop.f32.mrf.mxu0
      %v477 = vadd.f32 0.0, %v476
      %v478 = vpop.f32.mrf.mxu0
      %v479 = vadd.f32 0.0, %v478
      %v480 = vpop.f32.mrf.mxu0
      %v481 = vadd.f32 0.0, %v480
      %v482 = vpop.f32.mrf.mxu0
      %v483 = vadd.f32 0.0, %v482
      %484 = vmatprep.mubr.bf16.mxu0 0
      %485 = vmatmul.mubr.bf16.gmra.mxu0 %v390
      %v486 = vpop.f32.mrf.mxu0
      %v487 = vadd.f32 0.0, %v486
      %v488 = vpop.f32.mrf.mxu0
      %v489 = vadd.f32 0.0, %v488
      %v490 = vpop.f32.mrf.mxu0
      %v491 = vpop.f32.mrf.mxu0
      %492 = vdwg.mxu0
      %v493 = vxor.u32 %v427, 2147483648
      %v494 = vxor.u32 %v429, 2147483648
      %v495 = vxor.u32 %v431, 2147483648
      %v496 = vxor.u32 %v433, 2147483648
      %v497 = vxor.u32 %v437, 2147483648
      %v498 = vxor.u32 %v439, 2147483648
      %v499 = vxor.u32 %v441, 2147483648
      %v500 = vxor.u32 %v443, 2147483648
      %v501 = vxor.u32 %v447, 2147483648
      %v502 = vxor.u32 %v449, 2147483648
      %v503 = vxor.u32 %v451, 2147483648
      %v504 = vxor.u32 %v453, 2147483648
      %v505 = vxor.u32 %v457, 2147483648
      %v506 = vxor.u32 %v459, 2147483648
      %v507 = vxor.u32 %v461, 2147483648
      %v508 = vxor.u32 %v463, 2147483648
      %v509 = vxor.u32 %v467, 2147483648
      %v510 = vxor.u32 %v469, 2147483648
      %v511 = vxor.u32 %v471, 2147483648
      %v512 = vxor.u32 %v473, 2147483648
      %v513 = vxor.u32 %v477, 2147483648
      %v514 = vxor.u32 %v479, 2147483648
      %v515 = vxor.u32 %v481, 2147483648
      %v516 = vxor.u32 %v483, 2147483648
      %v517 = vxor.u32 %v487, 2147483648
      %v518 = vxor.u32 %v489, 2147483648
      %v519 = vmul.f32 %v493, 1.442695
      %v520 = vpow.pop %v519
      %v521 = vmul.f32 %v494, 1.442695
      %v522 = vpow.pop %v521
      %v523 = vmul.f32 %v495, 1.442695
      %v524 = vpow.pop %v523
      %v525 = vmul.f32 %v496, 1.442695
      %v526 = vpow.pop %v525
      %v527 = vmul.f32 %v497, 1.442695
      %v528 = vpow.pop %v527
      %v529 = vmul.f32 %v498, 1.442695
      %v530 = vpow.pop %v529
      %v531 = vmul.f32 %v499, 1.442695
      %v532 = vpow.pop %v531
      %v533 = vmul.f32 %v500, 1.442695
      %v534 = vpow.pop %v533
      %v535 = vmul.f32 %v501, 1.442695
      %v536 = vpow.pop %v535
      %v537 = vmul.f32 %v502, 1.442695
      %v538 = vpow.pop %v537
      %v539 = vmul.f32 %v503, 1.442695
      %v540 = vpow.pop %v539
      %v541 = vmul.f32 %v504, 1.442695
      %v542 = vpow.pop %v541
      %v543 = vmul.f32 %v505, 1.442695
      %v544 = vpow.pop %v543
      %v545 = vmul.f32 %v506, 1.442695
      %v546 = vpow.pop %v545
      %v547 = vmul.f32 %v507, 1.442695
      %v548 = vpow.pop %v547
      %v549 = vmul.f32 %v508, 1.442695
      %v550 = vpow.pop %v549
      %v551 = vmul.f32 %v509, 1.442695
      %v552 = vpow.pop %v551
      %v553 = vmul.f32 %v510, 1.442695
      %v554 = vpow.pop %v553
      %v555 = vmul.f32 %v511, 1.442695
      %v556 = vpow.pop %v555
      %v557 = vmul.f32 %v512, 1.442695
      %v558 = vpow.pop %v557
      %v559 = vmul.f32 %v513, 1.442695
      %v560 = vpow.pop %v559
      %v561 = vmul.f32 %v514, 1.442695
      %v562 = vpow.pop %v561
      %v563 = vmul.f32 %v515, 1.442695
      %v564 = vpow.pop %v563
      %v565 = vmul.f32 %v516, 1.442695
      %v566 = vpow.pop %v565
      %v567 = vmul.f32 %v517, 1.442695
      %v568 = vpow.pop %v567
      %v569 = vmul.f32 %v518, 1.442695
      %v570 = vpow.pop %v569
      %v571 = vadd.f32 %v520, 1.0
      %v572 = vadd.f32 %v522, 1.0
      %v573 = vadd.f32 %v524, 1.0
      %v574 = vadd.f32 %v526, 1.0
      %v575 = vadd.f32 %v528, 1.0
      %v576 = vadd.f32 %v530, 1.0
      %v577 = vadd.f32 %v532, 1.0
      %v578 = vadd.f32 %v534, 1.0
      %v579 = vadd.f32 %v536, 1.0
      %v580 = vadd.f32 %v538, 1.0
      %v581 = vadd.f32 %v540, 1.0
      %v582 = vadd.f32 %v542, 1.0
      %v583 = vadd.f32 %v544, 1.0
      %v584 = vadd.f32 %v546, 1.0
      %v585 = vadd.f32 %v548, 1.0
      %v586 = vadd.f32 %v550, 1.0
      %v587 = vadd.f32 %v552, 1.0
      %v588 = vadd.f32 %v554, 1.0
      %v589 = vadd.f32 %v556, 1.0
      %v590 = vadd.f32 %v558, 1.0
      %v591 = vadd.f32 %v560, 1.0
      %v592 = vadd.f32 %v562, 1.0
      %v593 = vadd.f32 %v564, 1.0
      %v594 = vadd.f32 %v566, 1.0
      %v595 = vadd.f32 %v568, 1.0
      %v596 = vadd.f32 %v570, 1.0
      %v597 = vrcp.pop %v571
      %v598 = vmul.f32 1.0, %v597
      %v599 = vrcp.pop %v572
      %v600 = vmul.f32 1.0, %v599
      %v601 = vrcp.pop %v573
      %v602 = vmul.f32 1.0, %v601
      %v603 = vrcp.pop %v574
      %v604 = vmul.f32 1.0, %v603
      %v605 = vrcp.pop %v575
      %v606 = vmul.f32 1.0, %v605
      %v607 = vrcp.pop %v576
      %v608 = vmul.f32 1.0, %v607
      %v609 = vrcp.pop %v577
      %v610 = vmul.f32 1.0, %v609
      %v611 = vrcp.pop %v578
      %v612 = vmul.f32 1.0, %v611
      %v613 = vrcp.pop %v579
      %v614 = vmul.f32 1.0, %v613
      %v615 = vrcp.pop %v580
      %v616 = vmul.f32 1.0, %v615
      %v617 = vrcp.pop %v581
      %v618 = vmul.f32 1.0, %v617
      %v619 = vrcp.pop %v582
      %v620 = vmul.f32 1.0, %v619
      %v621 = vrcp.pop %v583
      %v622 = vmul.f32 1.0, %v621
      %v623 = vrcp.pop %v584
      %v624 = vmul.f32 1.0, %v623
      %v625 = vrcp.pop %v585
      %v626 = vmul.f32 1.0, %v625
      %v627 = vrcp.pop %v586
      %v628 = vmul.f32 1.0, %v627
      %v629 = vrcp.pop %v587
      %v630 = vmul.f32 1.0, %v629
      %v631 = vrcp.pop %v588
      %v632 = vmul.f32 1.0, %v631
      %v633 = vrcp.pop %v589
      %v634 = vmul.f32 1.0, %v633
      %v635 = vrcp.pop %v590
      %v636 = vmul.f32 1.0, %v635
      %v637 = vrcp.pop %v591
      %v638 = vmul.f32 1.0, %v637
      %v639 = vrcp.pop %v592
      %v640 = vmul.f32 1.0, %v639
      %v641 = vrcp.pop %v593
      %v642 = vmul.f32 1.0, %v641
      %v643 = vrcp.pop %v594
      %v644 = vmul.f32 1.0, %v643
      %v645 = vrcp.pop %v595
      %v646 = vmul.f32 1.0, %v645
      %v647 = vrcp.pop %v596
      %v648 = vmul.f32 1.0, %v647
      %v649 = vld [vmem:[%s282] sm:$0xff]
      %v650 = vld [vmem:[%s282 + $0x8] sm:$0xff]
      %v651 = vld [vmem:[%s282 + $0x10] sm:$0xff]
      %v652 = vld [vmem:[%s282 + $0x18] sm:$0xff]
      %v653 = vld [vmem:[%s282 + $0x20] sm:$0xff]
      %v654 = vld [vmem:[%s282 + $0x28] sm:$0xff]
      %v655 = vld [vmem:[%s282 + $0x30] sm:$0xff]
      %v656 = vld [vmem:[%s282 + $0x38] sm:$0xff]
      %v657 = vld [vmem:[%s282 + $0x40] sm:$0xff]
      %v658 = vld [vmem:[%s282 + $0x48] sm:$0xff]
      %v659 = vld [vmem:[%s282 + $0x50] sm:$0xff]
      %v660 = vld [vmem:[%s282 + $0x58] sm:$0xff]
      %v661 = vld [vmem:[%s282 + $0x60] sm:$0xf]
      %v662 = vld [vmem:[%s287] ss:$2 sm:$0x3]
      %s663 = scalar_lea.vmem %s287, 1
      %v664 = vld [vmem:[%s663] ss:$2 sm:$0x3]
      %v666 = vlaneseq
      %v667 = vshrl.u32 %v666, 7
      %v668 = vsub.s32 0, %v667
      %v669 = vrot.slane %v662, %v668
      %v670 = vlaneseq
      %v671 = vshrl.u32 %v670, 7
      %v672 = vsub.s32 1, %v671
      %v673 = vrot.slane %v662, %v672
      %677 = vset.pattern.permute.xlu0 0
      %678 = vperm.xlu0 %677, %v649
      %v679 = vpop.permute.xlu0 %678
      %682 = vset.pattern.permute.xlu0 0
      %683 = vperm.xlu0 %682, %v650
      %v684 = vpop.permute.xlu0 %683
      %687 = vset.pattern.permute.xlu0 0
      %688 = vperm.xlu0 %687, %v651
      %v689 = vpop.permute.xlu0 %688
      %692 = vset.pattern.permute.xlu0 0
      %693 = vperm.xlu0 %692, %v652
      %v694 = vpop.permute.xlu0 %693
      %697 = vset.pattern.permute.xlu0 0
      %698 = vperm.xlu0 %697, %v653
      %v699 = vpop.permute.xlu0 %698
      %702 = vset.pattern.permute.xlu0 0
      %703 = vperm.xlu0 %702, %v654
      %v704 = vpop.permute.xlu0 %703
      %707 = vset.pattern.permute.xlu0 0
      %708 = vperm.xlu0 %707, %v655
      %v709 = vpop.permute.xlu0 %708
      %712 = vset.pattern.permute.xlu0 0
      %713 = vperm.xlu0 %712, %v656
      %v714 = vpop.permute.xlu0 %713
      %717 = vset.pattern.permute.xlu0 0
      %718 = vperm.xlu0 %717, %v657
      %v719 = vpop.permute.xlu0 %718
      %722 = vset.pattern.permute.xlu0 0
      %723 = vperm.xlu0 %722, %v658
      %v724 = vpop.permute.xlu0 %723
      %727 = vset.pattern.permute.xlu0 0
      %728 = vperm.xlu0 %727, %v659
      %v729 = vpop.permute.xlu0 %728
      %732 = vset.pattern.permute.xlu0 0
      %733 = vperm.xlu0 %732, %v660
      %v734 = vpop.permute.xlu0 %733
      %737 = vset.pattern.permute.xlu0 0
      %738 = vperm.xlu0 %737, %v661
      %v739 = vpop.permute.xlu0 %738
      %vm741 = vcmp.ge.f32.partialorder %v669, %v679
      %vm742 = vcmp.ge.f32.partialorder %v673, %v679
      %vm743 = vcmp.ge.f32.partialorder %v669, %v684
      %vm744 = vcmp.ge.f32.partialorder %v673, %v684
      %vm745 = vcmp.ge.f32.partialorder %v669, %v689
      %vm746 = vcmp.ge.f32.partialorder %v673, %v689
      %vm747 = vcmp.ge.f32.partialorder %v669, %v694
      %vm748 = vcmp.ge.f32.partialorder %v673, %v694
      %vm749 = vcmp.ge.f32.partialorder %v669, %v699
      %vm750 = vcmp.ge.f32.partialorder %v673, %v699
      %vm751 = vcmp.ge.f32.partialorder %v669, %v704
      %vm752 = vcmp.ge.f32.partialorder %v673, %v704
      %vm753 = vcmp.ge.f32.partialorder %v669, %v709
      %vm754 = vcmp.ge.f32.partialorder %v673, %v709
      %vm755 = vcmp.ge.f32.partialorder %v669, %v714
      %vm756 = vcmp.ge.f32.partialorder %v673, %v714
      %vm757 = vcmp.ge.f32.partialorder %v669, %v719
      %vm758 = vcmp.ge.f32.partialorder %v673, %v719
      %vm759 = vcmp.ge.f32.partialorder %v669, %v724
      %vm760 = vcmp.ge.f32.partialorder %v673, %v724
      %vm761 = vcmp.ge.f32.partialorder %v669, %v729
      %vm762 = vcmp.ge.f32.partialorder %v673, %v729
      %vm763 = vcmp.ge.f32.partialorder %v669, %v734
      %vm764 = vcmp.ge.f32.partialorder %v673, %v734
      %vm765 = vcmp.ge.f32.partialorder %v669, %v739
      %vm766 = vcmp.ge.f32.partialorder %v673, %v739
      %767 = vset.pattern.permute.xlu0 2
      %768 = vperm.xlu0 %767, %v649
      %v769 = vpop.permute.xlu0 %768
      %771 = vset.pattern.permute.xlu0 2
      %772 = vperm.xlu0 %771, %v650
      %v773 = vpop.permute.xlu0 %772
      %775 = vset.pattern.permute.xlu0 2
      %776 = vperm.xlu0 %775, %v651
      %v777 = vpop.permute.xlu0 %776
      %779 = vset.pattern.permute.xlu0 2
      %780 = vperm.xlu0 %779, %v652
      %v781 = vpop.permute.xlu0 %780
      %783 = vset.pattern.permute.xlu0 2
      %784 = vperm.xlu0 %783, %v653
      %v785 = vpop.permute.xlu0 %784
      %787 = vset.pattern.permute.xlu0 2
      %788 = vperm.xlu0 %787, %v654
      %v789 = vpop.permute.xlu0 %788
      %791 = vset.pattern.permute.xlu0 2
      %792 = vperm.xlu0 %791, %v655
      %v793 = vpop.permute.xlu0 %792
      %795 = vset.pattern.permute.xlu0 2
      %796 = vperm.xlu0 %795, %v656
      %v797 = vpop.permute.xlu0 %796
      %799 = vset.pattern.permute.xlu0 2
      %800 = vperm.xlu0 %799, %v657
      %v801 = vpop.permute.xlu0 %800
      %803 = vset.pattern.permute.xlu0 2
      %804 = vperm.xlu0 %803, %v658
      %v805 = vpop.permute.xlu0 %804
      %807 = vset.pattern.permute.xlu0 2
      %808 = vperm.xlu0 %807, %v659
      %v809 = vpop.permute.xlu0 %808
      %811 = vset.pattern.permute.xlu0 2
      %812 = vperm.xlu0 %811, %v660
      %v813 = vpop.permute.xlu0 %812
      %815 = vset.pattern.permute.xlu0 2
      %816 = vperm.xlu0 %815, %v661
      %v817 = vpop.permute.xlu0 %816
      %vm819 = vcmp.lt.f32.partialorder %v669, %v769
      %vm820 = vcmp.lt.f32.partialorder %v673, %v769
      %vm821 = vcmp.lt.f32.partialorder %v669, %v773
      %vm822 = vcmp.lt.f32.partialorder %v673, %v773
      %vm823 = vcmp.lt.f32.partialorder %v669, %v777
      %vm824 = vcmp.lt.f32.partialorder %v673, %v777
      %vm825 = vcmp.lt.f32.partialorder %v669, %v781
      %vm826 = vcmp.lt.f32.partialorder %v673, %v781
      %vm827 = vcmp.lt.f32.partialorder %v669, %v785
      %vm828 = vcmp.lt.f32.partialorder %v673, %v785
      %vm829 = vcmp.lt.f32.partialorder %v669, %v789
      %vm830 = vcmp.lt.f32.partialorder %v673, %v789
      %vm831 = vcmp.lt.f32.partialorder %v669, %v793
      %vm832 = vcmp.lt.f32.partialorder %v673, %v793
      %vm833 = vcmp.lt.f32.partialorder %v669, %v797
      %vm834 = vcmp.lt.f32.partialorder %v673, %v797
      %vm835 = vcmp.lt.f32.partialorder %v669, %v801
      %vm836 = vcmp.lt.f32.partialorder %v673, %v801
      %vm837 = vcmp.lt.f32.partialorder %v669, %v805
      %vm838 = vcmp.lt.f32.partialorder %v673, %v805
      %vm839 = vcmp.lt.f32.partialorder %v669, %v809
      %vm840 = vcmp.lt.f32.partialorder %v673, %v809
      %vm841 = vcmp.lt.f32.partialorder %v669, %v813
      %vm842 = vcmp.lt.f32.partialorder %v673, %v813
      %vm843 = vcmp.lt.f32.partialorder %v669, %v817
      %vm844 = vcmp.lt.f32.partialorder %v673, %v817
      %vm845 = vmand %vm741, %vm819
      %vm846 = vmand %vm742, %vm820
      %vm847 = vmand %vm743, %vm821
      %vm848 = vmand %vm744, %vm822
      %vm849 = vmand %vm745, %vm823
      %vm850 = vmand %vm746, %vm824
      %vm851 = vmand %vm747, %vm825
      %vm852 = vmand %vm748, %vm826
      %vm853 = vmand %vm749, %vm827
      %vm854 = vmand %vm750, %vm828
      %vm855 = vmand %vm751, %vm829
      %vm856 = vmand %vm752, %vm830
      %vm857 = vmand %vm753, %vm831
      %vm858 = vmand %vm754, %vm832
      %vm859 = vmand %vm755, %vm833
      %vm860 = vmand %vm756, %vm834
      %vm861 = vmand %vm757, %vm835
      %vm862 = vmand %vm758, %vm836
      %vm863 = vmand %vm759, %vm837
      %vm864 = vmand %vm760, %vm838
      %vm865 = vmand %vm761, %vm839
      %vm866 = vmand %vm762, %vm840
      %vm867 = vmand %vm763, %vm841
      %vm868 = vmand %vm764, %vm842
      %vm869 = vmand %vm765, %vm843
      %vm870 = vmand %vm766, %vm844
      %v872 = vlaneseq
      %v873 = vshrl.u32 %v872, 7
      %v874 = vsub.s32 0, %v873
      %v875 = vrot.slane %v664, %v874
      %v876 = vlaneseq
      %v877 = vshrl.u32 %v876, 7
      %v878 = vsub.s32 1, %v877
      %v879 = vrot.slane %v664, %v878
      %882 = vset.pattern.permute.xlu0 1
      %883 = vperm.xlu0 %882, %v649
      %v884 = vpop.permute.xlu0 %883
      %886 = vset.pattern.permute.xlu0 1
      %887 = vperm.xlu0 %886, %v650
      %v888 = vpop.permute.xlu0 %887
      %890 = vset.pattern.permute.xlu0 1
      %891 = vperm.xlu0 %890, %v651
      %v892 = vpop.permute.xlu0 %891
      %894 = vset.pattern.permute.xlu0 1
      %895 = vperm.xlu0 %894, %v652
      %v896 = vpop.permute.xlu0 %895
      %898 = vset.pattern.permute.xlu0 1
      %899 = vperm.xlu0 %898, %v653
      %v900 = vpop.permute.xlu0 %899
      %902 = vset.pattern.permute.xlu0 1
      %903 = vperm.xlu0 %902, %v654
      %v904 = vpop.permute.xlu0 %903
      %906 = vset.pattern.permute.xlu0 1
      %907 = vperm.xlu0 %906, %v655
      %v908 = vpop.permute.xlu0 %907
      %910 = vset.pattern.permute.xlu0 1
      %911 = vperm.xlu0 %910, %v656
      %v912 = vpop.permute.xlu0 %911
      %914 = vset.pattern.permute.xlu0 1
      %915 = vperm.xlu0 %914, %v657
      %v916 = vpop.permute.xlu0 %915
      %918 = vset.pattern.permute.xlu0 1
      %919 = vperm.xlu0 %918, %v658
      %v920 = vpop.permute.xlu0 %919
      %922 = vset.pattern.permute.xlu0 1
      %923 = vperm.xlu0 %922, %v659
      %v924 = vpop.permute.xlu0 %923
      %926 = vset.pattern.permute.xlu0 1
      %927 = vperm.xlu0 %926, %v660
      %v928 = vpop.permute.xlu0 %927
      %930 = vset.pattern.permute.xlu0 1
      %931 = vperm.xlu0 %930, %v661
      %v932 = vpop.permute.xlu0 %931
      %vm934 = vcmp.ge.f32.partialorder %v875, %v884
      %vm935 = vcmp.ge.f32.partialorder %v879, %v884
      %vm936 = vcmp.ge.f32.partialorder %v875, %v888
      %vm937 = vcmp.ge.f32.partialorder %v879, %v888
      %vm938 = vcmp.ge.f32.partialorder %v875, %v892
      %vm939 = vcmp.ge.f32.partialorder %v879, %v892
      %vm940 = vcmp.ge.f32.partialorder %v875, %v896
      %vm941 = vcmp.ge.f32.partialorder %v879, %v896
      %vm942 = vcmp.ge.f32.partialorder %v875, %v900
      %vm943 = vcmp.ge.f32.partialorder %v879, %v900
      %vm944 = vcmp.ge.f32.partialorder %v875, %v904
      %vm945 = vcmp.ge.f32.partialorder %v879, %v904
      %vm946 = vcmp.ge.f32.partialorder %v875, %v908
      %vm947 = vcmp.ge.f32.partialorder %v879, %v908
      %vm948 = vcmp.ge.f32.partialorder %v875, %v912
      %vm949 = vcmp.ge.f32.partialorder %v879, %v912
      %vm950 = vcmp.ge.f32.partialorder %v875, %v916
      %vm951 = vcmp.ge.f32.partialorder %v879, %v916
      %vm952 = vcmp.ge.f32.partialorder %v875, %v920
      %vm953 = vcmp.ge.f32.partialorder %v879, %v920
      %vm954 = vcmp.ge.f32.partialorder %v875, %v924
      %vm955 = vcmp.ge.f32.partialorder %v879, %v924
      %vm956 = vcmp.ge.f32.partialorder %v875, %v928
      %vm957 = vcmp.ge.f32.partialorder %v879, %v928
      %vm958 = vcmp.ge.f32.partialorder %v875, %v932
      %vm959 = vcmp.ge.f32.partialorder %v879, %v932
      %vm960 = vmand %vm845, %vm934
      %vm961 = vmand %vm846, %vm935
      %vm962 = vmand %vm847, %vm936
      %vm963 = vmand %vm848, %vm937
      %vm964 = vmand %vm849, %vm938
      %vm965 = vmand %vm850, %vm939
      %vm966 = vmand %vm851, %vm940
      %vm967 = vmand %vm852, %vm941
      %vm968 = vmand %vm853, %vm942
      %vm969 = vmand %vm854, %vm943
      %vm970 = vmand %vm855, %vm944
      %vm971 = vmand %vm856, %vm945
      %vm972 = vmand %vm857, %vm946
      %vm973 = vmand %vm858, %vm947
      %vm974 = vmand %vm859, %vm948
      %vm975 = vmand %vm860, %vm949
      %vm976 = vmand %vm861, %vm950
      %vm977 = vmand %vm862, %vm951
      %vm978 = vmand %vm863, %vm952
      %vm979 = vmand %vm864, %vm953
      %vm980 = vmand %vm865, %vm954
      %vm981 = vmand %vm866, %vm955
      %vm982 = vmand %vm867, %vm956
      %vm983 = vmand %vm868, %vm957
      %vm984 = vmand %vm869, %vm958
      %vm985 = vmand %vm870, %vm959
      %986 = vset.pattern.permute.xlu0 3
      %987 = vperm.xlu0 %986, %v649
      %v988 = vpop.permute.xlu0 %987
      %990 = vset.pattern.permute.xlu0 3
      %991 = vperm.xlu0 %990, %v650
      %v992 = vpop.permute.xlu0 %991
      %994 = vset.pattern.permute.xlu0 3
      %995 = vperm.xlu0 %994, %v651
      %v996 = vpop.permute.xlu0 %995
      %998 = vset.pattern.permute.xlu0 3
      %999 = vperm.xlu0 %998, %v652
      %v1000 = vpop.permute.xlu0 %999
      %1002 = vset.pattern.permute.xlu0 3
      %1003 = vperm.xlu0 %1002, %v653
      %v1004 = vpop.permute.xlu0 %1003
      %1006 = vset.pattern.permute.xlu0 3
      %1007 = vperm.xlu0 %1006, %v654
      %v1008 = vpop.permute.xlu0 %1007
      %1010 = vset.pattern.permute.xlu0 3
      %1011 = vperm.xlu0 %1010, %v655
      %v1012 = vpop.permute.xlu0 %1011
      %1014 = vset.pattern.permute.xlu0 3
      %1015 = vperm.xlu0 %1014, %v656
      %v1016 = vpop.permute.xlu0 %1015
      %1018 = vset.pattern.permute.xlu0 3
      %1019 = vperm.xlu0 %1018, %v657
      %v1020 = vpop.permute.xlu0 %1019
      %1022 = vset.pattern.permute.xlu0 3
      %1023 = vperm.xlu0 %1022, %v658
      %v1024 = vpop.permute.xlu0 %1023
      %1026 = vset.pattern.permute.xlu0 3
      %1027 = vperm.xlu0 %1026, %v659
      %v1028 = vpop.permute.xlu0 %1027
      %1030 = vset.pattern.permute.xlu0 3
      %1031 = vperm.xlu0 %1030, %v660
      %v1032 = vpop.permute.xlu0 %1031
      %1034 = vset.pattern.permute.xlu0 3
      %1035 = vperm.xlu0 %1034, %v661
      %v1036 = vpop.permute.xlu0 %1035
      %vm1038 = vcmp.lt.f32.partialorder %v875, %v988
      %vm1039 = vcmp.lt.f32.partialorder %v879, %v988
      %vm1040 = vcmp.lt.f32.partialorder %v875, %v992
      %vm1041 = vcmp.lt.f32.partialorder %v879, %v992
      %vm1042 = vcmp.lt.f32.partialorder %v875, %v996
      %vm1043 = vcmp.lt.f32.partialorder %v879, %v996
      %vm1044 = vcmp.lt.f32.partialorder %v875, %v1000
      %vm1045 = vcmp.lt.f32.partialorder %v879, %v1000
      %vm1046 = vcmp.lt.f32.partialorder %v875, %v1004
      %vm1047 = vcmp.lt.f32.partialorder %v879, %v1004
      %vm1048 = vcmp.lt.f32.partialorder %v875, %v1008
      %vm1049 = vcmp.lt.f32.partialorder %v879, %v1008
      %vm1050 = vcmp.lt.f32.partialorder %v875, %v1012
      %vm1051 = vcmp.lt.f32.partialorder %v879, %v1012
      %vm1052 = vcmp.lt.f32.partialorder %v875, %v1016
      %vm1053 = vcmp.lt.f32.partialorder %v879, %v1016
      %vm1054 = vcmp.lt.f32.partialorder %v875, %v1020
      %vm1055 = vcmp.lt.f32.partialorder %v879, %v1020
      %vm1056 = vcmp.lt.f32.partialorder %v875, %v1024
      %vm1057 = vcmp.lt.f32.partialorder %v879, %v1024
      %vm1058 = vcmp.lt.f32.partialorder %v875, %v1028
      %vm1059 = vcmp.lt.f32.partialorder %v879, %v1028
      %vm1060 = vcmp.lt.f32.partialorder %v875, %v1032
      %vm1061 = vcmp.lt.f32.partialorder %v879, %v1032
      %vm1062 = vcmp.lt.f32.partialorder %v875, %v1036
      %vm1063 = vcmp.lt.f32.partialorder %v879, %v1036
      %vm1064 = vmand %vm960, %vm1038
      %vm1065 = vmand %vm961, %vm1039
      %vm1066 = vmand %vm962, %vm1040
      %vm1067 = vmand %vm963, %vm1041
      %vm1068 = vmand %vm964, %vm1042
      %vm1069 = vmand %vm965, %vm1043
      %vm1070 = vmand %vm966, %vm1044
      %vm1071 = vmand %vm967, %vm1045
      %vm1072 = vmand %vm968, %vm1046
      %vm1073 = vmand %vm969, %vm1047
      %vm1074 = vmand %vm970, %vm1048
      %vm1075 = vmand %vm971, %vm1049
      %vm1076 = vmand %vm972, %vm1050
      %vm1077 = vmand %vm973, %vm1051
      %vm1078 = vmand %vm974, %vm1052
      %vm1079 = vmand %vm975, %vm1053
      %vm1080 = vmand %vm976, %vm1054
      %vm1081 = vmand %vm977, %vm1055
      %vm1082 = vmand %vm978, %vm1056
      %vm1083 = vmand %vm979, %vm1057
      %vm1084 = vmand %vm980, %vm1058
      %vm1085 = vmand %vm981, %vm1059
      %vm1086 = vmand %vm982, %vm1060
      %vm1087 = vmand %vm983, %vm1061
      %vm1088 = vmand %vm984, %vm1062
      %vm1089 = vmand %vm985, %vm1063
      %v1090 = vsel %vm1064, %v598, 0.0
      %v1091 = vsel %vm1065, %v600, 0.0
      %v1092 = vsel %vm1066, %v602, 0.0
      %v1093 = vsel %vm1067, %v604, 0.0
      %v1094 = vsel %vm1068, %v606, 0.0
      %v1095 = vsel %vm1069, %v608, 0.0
      %v1096 = vsel %vm1070, %v610, 0.0
      %v1097 = vsel %vm1071, %v612, 0.0
      %v1098 = vsel %vm1072, %v614, 0.0
      %v1099 = vsel %vm1073, %v616, 0.0
      %v1100 = vsel %vm1074, %v618, 0.0
      %v1101 = vsel %vm1075, %v620, 0.0
      %v1102 = vsel %vm1076, %v622, 0.0
      %v1103 = vsel %vm1077, %v624, 0.0
      %v1104 = vsel %vm1078, %v626, 0.0
      %v1105 = vsel %vm1079, %v628, 0.0
      %v1106 = vsel %vm1080, %v630, 0.0
      %v1107 = vsel %vm1081, %v632, 0.0
      %v1108 = vsel %vm1082, %v634, 0.0
      %v1109 = vsel %vm1083, %v636, 0.0
      %v1110 = vsel %vm1084, %v638, 0.0
      %v1111 = vsel %vm1085, %v640, 0.0
      %v1112 = vsel %vm1086, %v642, 0.0
      %v1113 = vsel %vm1087, %v644, 0.0
      %v1114 = vsel %vm1088, %v646, 0.0
      %v1115 = vsel %vm1089, %v648, 0.0
      %1116 = vst [vmem:[%s297] sm:$0xff] %v1090
      %1117 = vst [vmem:[%s297 + $0x8] sm:$0xff] %v1091
      %1118 = vst [vmem:[%s297 + $0x10] sm:$0xff] %v1092
      %1119 = vst [vmem:[%s297 + $0x18] sm:$0xff] %v1093
      %1120 = vst [vmem:[%s297 + $0x20] sm:$0xff] %v1094
      %1121 = vst [vmem:[%s297 + $0x28] sm:$0xff] %v1095
      %1122 = vst [vmem:[%s297 + $0x30] sm:$0xff] %v1096
      %1123 = vst [vmem:[%s297 + $0x38] sm:$0xff] %v1097
      %1124 = vst [vmem:[%s297 + $0x40] sm:$0xff] %v1098
      %1125 = vst [vmem:[%s297 + $0x48] sm:$0xff] %v1099
      %1126 = vst [vmem:[%s297 + $0x50] sm:$0xff] %v1100
      %1127 = vst [vmem:[%s297 + $0x58] sm:$0xff] %v1101
      %1128 = vst [vmem:[%s297 + $0x60] sm:$0xff] %v1102
      %1129 = vst [vmem:[%s297 + $0x68] sm:$0xff] %v1103
      %1130 = vst [vmem:[%s297 + $0x70] sm:$0xff] %v1104
      %1131 = vst [vmem:[%s297 + $0x78] sm:$0xff] %v1105
      %1132 = vst [vmem:[%s297 + $0x80] sm:$0xff] %v1106
      %1133 = vst [vmem:[%s297 + $0x88] sm:$0xff] %v1107
      %1134 = vst [vmem:[%s297 + $0x90] sm:$0xff] %v1108
      %1135 = vst [vmem:[%s297 + $0x98] sm:$0xff] %v1109
      %1136 = vst [vmem:[%s297 + $0xa0] sm:$0xff] %v1110
      %1137 = vst [vmem:[%s297 + $0xa8] sm:$0xff] %v1111
      %1138 = vst [vmem:[%s297 + $0xb0] sm:$0xff] %v1112
      %1139 = vst [vmem:[%s297 + $0xb8] sm:$0xff] %v1113
      %1140 = vst [vmem:[%s297 + $0xc0] sm:$0xf] %v1114
      %1141 = vst [vmem:[%s297 + $0xc8] sm:$0xf] %v1115
      %s1142 = smul.u32 2, %s20
      %p1143 = scmp.lt.s32.totalorder %s19, 1
      %s1144 = scalar_select %p1143, %s19, 1
      %p1145 = scmp.lt.s32.totalorder %s1142, 1
      %s1146 = scalar_select %p1145, %s1142, 1
      %s1147 = smul.addr %s1144, 26
      %s1148 = sadd.s32 %s1146, %s1147
      %s1149 = smul.addr %s1148, 8
      %s1150 = scalar_lea.vmem %s4, %s1149
      // Predicated region
      $region37: #{onnx_trt_forward.3} parent=35 // pred_check
        %p1151 = pneg %p153
      $region38: #{onnx_trt_forward.3} parent=35 // pred_check_branch
        %1153 = sbr.rel (%p1151) target = $region40
      $region39: #{onnx_trt_forward.3} parent=35 // pred_region
        %s1154 = smul.u32 2, %s20
      $region40: #{onnx_trt_forward.3} parent=35 // pred_fallthru
        _
    $region36: #{onnx_trt_forward.3} parent=5 // pred_fallthru
      _
    %p1155 = scmp.le.s32.totalorder 2, %s10
    // Predicated region
    $region41: #{onnx_trt_forward.3} parent=5 // pred_check
      %p1156 = pneg %p1155
    $region42: #{onnx_trt_forward.3} parent=5 // pred_check_branch
      %1158 = sbr.rel (%p1156) target = $region44
    $region43: #{onnx_trt_forward.3} parent=5 // pred_region
      %s1159 = ssub.s32 %s10, 2
      // Predicated region
      $region45: #{onnx_trt_forward.3} parent=43 // pred_check
        %p1160 = pneg %p159
      $region46: #{onnx_trt_forward.3} parent=43 // pred_check_branch
        %1162 = sbr.rel (%p1160) target = $region48
      $region47: #{onnx_trt_forward.3} parent=43 // pred_region
        %s1163 = smul.u32 2, %s22
        %p1164 = scmp.lt.s32.totalorder %s21, 1
        %s1165 = scalar_select %p1164, %s21, 1
        %p1166 = scmp.lt.s32.totalorder %s1163, 1
        %s1167 = scalar_select %p1166, %s1163, 1
        %s1168 = smul.addr %s1165, 26
        %s1169 = sadd.s32 %s1167, %s1168
        %s1170 = smul.addr %s1169, 8
        %s1171 = scalar_lea.vmem %s4, %s1170
      $region48: #{onnx_trt_forward.3} parent=43 // pred_fallthru
        _
    $region44: #{onnx_trt_forward.3} parent=5 // pred_fallthru
      _
  $region6: #{onnx_trt_forward.3} parent=0 // loop_footer
    %s14 = sadd.s32 1, %s10
  $region7: #{onnx_trt_forward.3} parent=0 // loop_footer_branch
    %9 = sbr.rel target = $region3
  $region8: #{onnx_trt_forward.3} parent=0 // loop_exit
    _

</llo_original>
